<compile_context>
chip_gen: v7x
topology: tpu7x:2x2x1
jax: 0.10.0
libtpu: 0.0.40
codegen_flags: <defaults>
</compile_context>

<pallas_src>
import functools

import jax
import jax.numpy as jnp
from jax import lax
from jax.experimental import pallas as pl
from jax.experimental.pallas import tpu as pltpu


def _make_lstm_decoder_kernel(T, B, H, L, n_pad, nt_pad):
    """Kernel factory. 4H == 128 when H == 32, so the packed gate tile is exactly lane-wide."""

    def kernel(tok_ref, emb_ref, wih_ref, whh_ref, b_ref, wdec_ref, bdec_ref, out_ref):
        # ---- In-kernel embedding gather (one-hot matmul), time-major (T*B, H) ----
        tok = tok_ref[...]                                             # (T*B, 1) int32
        iota = lax.broadcasted_iota(jnp.int32, (T * B, nt_pad), 1)     # 2-D iota (TPU req.)
        onehot = jnp.where(tok == iota, 1.0, 0.0).astype(jnp.float32)  # (T*B, nt_pad)
        x = jnp.dot(onehot, emb_ref[...], preferred_element_type=jnp.float32)  # (T*B, H)

        for l in range(L):  # num_layers is static -> unrolled
            # ---- Hoisted input projection: ONE (T*B, H) @ (H, 4H) matmul + fused bias ----
            # Off the serial chain; kept as a value (8 vregs), no VMEM scratch round trip.
            pre = (
                jnp.dot(x, wih_ref[l], preferred_element_type=jnp.float32)
                + b_ref[l]
            )                                                          # (T*B, 4H)
            w_hh = whh_ref[l]                                          # (H, 4H), loop-invariant

            h = jnp.zeros((B, H), jnp.float32)
            c = jnp.zeros((B, H), jnp.float32)
            hs = []
            for t in range(T):  # T static -> fully unrolled, static offsets
                # ONE packed MXU matmul per step on the latency-critical h chain.
                gates = pre[t * B:(t + 1) * B, :] + jnp.dot(
                    h, w_hh, preferred_element_type=jnp.float32)       # (B, 4H) = [i|f|g|o]
                # ONE sigmoid pass + ONE tanh pass over the packed vreg (EUP); the 32-lane
                # gate extractions below are static lane slices -> XLU rotates (free slot).
                sg = jax.nn.sigmoid(gates)
                tg = jnp.tanh(gates)
                i_g = sg[:, 0 * H:1 * H]
                f_g = sg[:, 1 * H:2 * H]
                g_g = tg[:, 2 * H:3 * H]
                o_g = sg[:, 3 * H:4 * H]
                c = f_g * c + i_g * g_g
                h = o_g * jnp.tanh(c)
                hs.append(h)

            # Next layer's input / decoder input: time-major (T*B, H), sublane concat (cheap).
            x = jnp.concatenate(hs, axis=0)

        # ---- Decoder: lane-dense (T*B, n_pad) output slab (unmasked full-width stores) ----
        out_ref[...] = (
            jnp.dot(x, wdec_ref[...], preferred_element_type=jnp.float32)
            + bdec_ref[...]
        )

    return kernel


def make_lstm_decoder(params, *, num_layers, hidden_dim, num_token):
    """One-time weight packing; returns a jitted forward(tokens) -> (B, T, num_token-1)."""
    H = hidden_dim
    L = num_layers
    n_out = num_token - 1
    n_pad = max(128, ((n_out + 127) // 128) * 128)      # lane-dense decoder width
    nt_pad = max(8, ((num_token + 7) // 8) * 8)         # padded K dim for one-hot gather

    # Packed gate weights, PyTorch order (i, f, g, o) along output columns:
    #   x @ wih_packed[l]  ==  x @ W_ih[l].T   (gate blocks already contiguous in columns)
    wih_packed = jnp.stack([params["wih"][l].T for l in range(L)], axis=0)   # (L, H, 4H)
    whh_packed = jnp.stack([params["whh"][l].T for l in range(L)], axis=0)   # (L, H, 4H)
    b_packed = jnp.stack(
        [(params["bih"][l] + params["bhh"][l])[None, :] for l in range(L)], axis=0)  # (L,1,4H)

    # Embedding table padded on the token axis (one-hot matmul K dim).
    emb_pad = jnp.zeros((nt_pad, H), jnp.float32).at[:num_token, :].set(
        params["emb"].astype(jnp.float32))

    # Lane-dense decoder weights: zero-pad output columns to n_pad.
    wdec_pad = jnp.zeros((H, n_pad), jnp.float32).at[:, :n_out].set(params["wdec"].T)
    bdec_pad = jnp.zeros((1, n_pad), jnp.float32).at[:, :n_out].set(params["bdec"][None, :])

    @jax.jit
    def forward(tokens):
        B, T = tokens.shape
        # Tiny int32 layout fixup (256 B): tokens (B, T) -> time-major column (T*B, 1).
        tok_col = jnp.transpose(tokens).reshape(T * B, 1).astype(jnp.int32)

        kernel = _make_lstm_decoder_kernel(T, B, H, L, n_pad, nt_pad)
        out_flat = pl.pallas_call(
            kernel,
            out_shape=jax.ShapeDtypeStruct((T * B, n_pad), jnp.float32),
            in_specs=[pl.BlockSpec(memory_space=pltpu.MemorySpace.VMEM)] * 7,
            out_specs=pl.BlockSpec(memory_space=pltpu.MemorySpace.VMEM),
        )(tok_col, emb_pad, wih_packed, whh_packed, b_packed, wdec_pad, bdec_pad)

        # Output fixup fuses under jit: (T*B, n_pad) -> (B, T, n_out).
        out = out_flat.reshape(T, B, n_pad)[:, :, :n_out]
        return jnp.transpose(out, (1, 0, 2))

    return forward


def reference_forward(tokens, params, *, num_layers, hidden_dim, num_token):
    """Pure-JAX reference with PyTorch nn.LSTM gate ordering (i, f, g, o)."""
    B, T = tokens.shape
    H = hidden_dim
    x = params["emb"][tokens].astype(jnp.float32)  # (B, T, H)
    for l in range(num_layers):
        h = jnp.zeros((B, H), jnp.float32)
        c = jnp.zeros((B, H), jnp.float32)
        outs = []
        for t in range(T):
            gates = (x[:, t] @ params["wih"][l].T + params["bih"][l]
                     + h @ params["whh"][l].T + params["bhh"][l])
            i_g = jax.nn.sigmoid(gates[:, 0 * H:1 * H])
            f_g = jax.nn.sigmoid(gates[:, 1 * H:2 * H])
            g_g = jnp.tanh(gates[:, 2 * H:3 * H])
            o_g = jax.nn.sigmoid(gates[:, 3 * H:4 * H])
            c = f_g * c + i_g * g_g
            h = o_g * jnp.tanh(c)
            outs.append(h)
        x = jnp.stack(outs, axis=1)
    return x @ params["wdec"].T + params["bdec"]


def init_params(key, *, num_layers, hidden_dim, num_token):
    H = hidden_dim
    n_out = num_token - 1
    keys = jax.random.split(key, 3 + 4 * num_layers)
    k_iter = iter(keys)
    scale = 0.1
    params = {
        "emb": scale * jax.random.normal(next(k_iter), (num_token, H), jnp.float32),
        "wih": [], "whh": [], "bih": [], "bhh": [],
    }
    for _ in range(num_layers):
        params["wih"].append(scale * jax.random.normal(next(k_iter), (4 * H, H), jnp.float32))
        params["whh"].append(scale * jax.random.normal(next(k_iter), (4 * H, H), jnp.float32))
        params["bih"].append(scale * jax.random.normal(next(k_iter), (4 * H,), jnp.float32))
        params["bhh"].append(scale * jax.random.normal(next(k_iter), (4 * H,), jnp.float32))
    params["wdec"] = scale * jax.random.normal(next(k_iter), (n_out, H), jnp.float32)
    params["bdec"] = scale * jax.random.normal(next(k_iter), (n_out,), jnp.float32)
    return params


if __name__ == "__main__":
    NUM_LAYERS = 2
    HIDDEN_DIM = 32
    NUM_TOKEN = 5
    BATCH = 8
    SEQ = 8

    key = jax.random.PRNGKey(0)
    k_tok, k_param = jax.random.split(key)

    tokens = jax.random.randint(k_tok, (BATCH, SEQ), 0, NUM_TOKEN, dtype=jnp.int32)
    params = init_params(k_param, num_layers=NUM_LAYERS, hidden_dim=HIDDEN_DIM,
                         num_token=NUM_TOKEN)

    # One-time weight packing (off the hot path), then a jitted forward.
    forward = make_lstm_decoder(params, num_layers=NUM_LAYERS, hidden_dim=HIDDEN_DIM,
                                num_token=NUM_TOKEN)
    out = jax.block_until_ready(forward(tokens))

    ref = jax.block_until_ready(
        reference_forward(tokens, params, num_layers=NUM_LAYERS,
                          hidden_dim=HIDDEN_DIM, num_token=NUM_TOKEN))

    assert out.shape == (BATCH, SEQ, NUM_TOKEN - 1), out.shape
    max_err = float(jnp.max(jnp.abs(out - ref)))
    assert jnp.allclose(out, ref, atol=1e-3, rtol=1e-3), max_err

    # TODO(synk): LSTMDecoder.decode() (autoregressive Categorical sampling with guide
    # sequences) is not part of forward() and is not implemented here.
    print("KERNEL_OK")
</pallas_src>

<mosaic_0001>
module attributes {stable_mosaic.version = 11 : i64} {
  func.func @kernel(%arg0: memref<64x1xi32, #tpu.memory_space<vmem>>, %arg1: memref<8x32xf32, #tpu.memory_space<vmem>>, %arg2: memref<2x32x128xf32, #tpu.memory_space<vmem>>, %arg3: memref<2x32x128xf32, #tpu.memory_space<vmem>>, %arg4: memref<2x1x128xf32, #tpu.memory_space<vmem>>, %arg5: memref<32x128xf32, #tpu.memory_space<vmem>>, %arg6: memref<1x128xf32, #tpu.memory_space<vmem>>, %arg7: memref<64x128xf32, #tpu.memory_space<vmem>>) attributes {dimension_semantics = [], scalar_prefetch = 0 : i64, scratch_operands = 0 : i64, tpu.core_type = #tpu.core_type<tc>} {
    %c0 = arith.constant 0 : index
    %c0_0 = arith.constant 0 : index
    %0 = vector.load %arg0[%c0, %c0_0] : memref<64x1xi32, #tpu.memory_space<vmem>>, vector<64x1xi32>
    %1 = tpu.iota {dimensions = array<i32: 1>} : vector<64x8xi32>
    %2 = vector.broadcast %0 : vector<64x1xi32> to vector<64x8xi32>
    %3 = arith.cmpi eq, %2, %1 : vector<64x8xi32>
    %cst = arith.constant 1.000000e+00 : f32
    %cst_1 = arith.constant 0.000000e+00 : f32
    %4 = vector.broadcast %cst : f32 to vector<64x8xf32>
    %5 = vector.broadcast %cst_1 : f32 to vector<64x8xf32>
    %6 = arith.select %3, %4, %5 : vector<64x8xi1>, vector<64x8xf32>
    %c0_2 = arith.constant 0 : index
    %c0_3 = arith.constant 0 : index
    %7 = vector.load %arg1[%c0_2, %c0_3] : memref<8x32xf32, #tpu.memory_space<vmem>>, vector<8x32xf32>
    %cst_4 = arith.constant dense<0.000000e+00> : vector<64x32xf32>
    %8 = tpu.matmul %6, %7, %cst_4 {dimension_numbers = #tpu.dot_dimension_numbers<[1], [0], [0], [1], [0, 0, 1, 1], [], []>} : vector<64x8xf32>, vector<8x32xf32>, vector<64x32xf32> -> vector<64x32xf32>
    %c0_5 = arith.constant 0 : index
    %c0_6 = arith.constant 0 : index
    %c0_7 = arith.constant 0 : index
    %9 = vector.load %arg2[%c0_5, %c0_6, %c0_7] : memref<2x32x128xf32, #tpu.memory_space<vmem>>, vector<1x32x128xf32>
    %10 = vector.shape_cast %9 : vector<1x32x128xf32> to vector<32x128xf32>
    %cst_8 = arith.constant dense<0.000000e+00> : vector<64x128xf32>
    %11 = tpu.matmul %8, %10, %cst_8 {dimension_numbers = #tpu.dot_dimension_numbers<[1], [0], [0], [1], [0, 0, 1, 1], [], []>} : vector<64x32xf32>, vector<32x128xf32>, vector<64x128xf32> -> vector<64x128xf32>
    %c0_9 = arith.constant 0 : index
    %c0_10 = arith.constant 0 : index
    %c0_11 = arith.constant 0 : index
    %12 = vector.load %arg4[%c0_9, %c0_10, %c0_11] : memref<2x1x128xf32, #tpu.memory_space<vmem>>, vector<1x1x128xf32>
    %13 = vector.shape_cast %12 : vector<1x1x128xf32> to vector<1x128xf32>
    %14 = vector.broadcast %13 : vector<1x128xf32> to vector<64x128xf32>
    %15 = arith.addf %11, %14 : vector<64x128xf32>
    %c0_12 = arith.constant 0 : index
    %c0_13 = arith.constant 0 : index
    %c0_14 = arith.constant 0 : index
    %16 = vector.load %arg3[%c0_12, %c0_13, %c0_14] : memref<2x32x128xf32, #tpu.memory_space<vmem>>, vector<1x32x128xf32>
    %17 = vector.shape_cast %16 : vector<1x32x128xf32> to vector<32x128xf32>
    %cst_15 = arith.constant 0.000000e+00 : f32
    %18 = vector.broadcast %cst_15 : f32 to vector<8x32xf32>
    %cst_16 = arith.constant 0.000000e+00 : f32
    %19 = vector.broadcast %cst_16 : f32 to vector<8x32xf32>
    %20 = vector.extract_strided_slice %15 {offsets = [0, 0], sizes = [8, 128], strides = [1, 1]} : vector<64x128xf32> to vector<8x128xf32>
    %cst_17 = arith.constant dense<0.000000e+00> : vector<8x128xf32>
    %21 = tpu.matmul %18, %17, %cst_17 {dimension_numbers = #tpu.dot_dimension_numbers<[1], [0], [0], [1], [0, 0, 1, 1], [], []>} : vector<8x32xf32>, vector<32x128xf32>, vector<8x128xf32> -> vector<8x128xf32>
    %22 = arith.addf %20, %21 : vector<8x128xf32>
    %23 = arith.negf %22 : vector<8x128xf32>
    %24 = math.exp %23 : vector<8x128xf32>
    %cst_18 = arith.constant 1.000000e+00 : f32
    %25 = vector.broadcast %cst_18 : f32 to vector<8x128xf32>
    %26 = arith.addf %25, %24 : vector<8x128xf32>
    %27 = arith.divf %25, %26 : vector<8x128xf32>
    %28 = math.tanh %22 : vector<8x128xf32>
    %29 = vector.extract_strided_slice %27 {offsets = [0, 0], sizes = [8, 32], strides = [1, 1]} : vector<8x128xf32> to vector<8x32xf32>
    %30 = vector.extract_strided_slice %27 {offsets = [0, 32], sizes = [8, 32], strides = [1, 1]} : vector<8x128xf32> to vector<8x32xf32>
    %31 = vector.extract_strided_slice %28 {offsets = [0, 64], sizes = [8, 32], strides = [1, 1]} : vector<8x128xf32> to vector<8x32xf32>
    %32 = vector.extract_strided_slice %27 {offsets = [0, 96], sizes = [8, 32], strides = [1, 1]} : vector<8x128xf32> to vector<8x32xf32>
    %33 = arith.mulf %30, %19 : vector<8x32xf32>
    %34 = arith.mulf %29, %31 : vector<8x32xf32>
    %35 = arith.addf %33, %34 : vector<8x32xf32>
    %36 = math.tanh %35 : vector<8x32xf32>
    %37 = arith.mulf %32, %36 : vector<8x32xf32>
    %38 = vector.extract_strided_slice %15 {offsets = [8, 0], sizes = [8, 128], strides = [1, 1]} : vector<64x128xf32> to vector<8x128xf32>
    %cst_19 = arith.constant dense<0.000000e+00> : vector<8x128xf32>
    %39 = tpu.matmul %37, %17, %cst_19 {dimension_numbers = #tpu.dot_dimension_numbers<[1], [0], [0], [1], [0, 0, 1, 1], [], []>} : vector<8x32xf32>, vector<32x128xf32>, vector<8x128xf32> -> vector<8x128xf32>
    %40 = arith.addf %38, %39 : vector<8x128xf32>
    %41 = arith.negf %40 : vector<8x128xf32>
    %42 = math.exp %41 : vector<8x128xf32>
    %cst_20 = arith.constant 1.000000e+00 : f32
    %43 = vector.broadcast %cst_20 : f32 to vector<8x128xf32>
    %44 = arith.addf %43, %42 : vector<8x128xf32>
    %45 = arith.divf %43, %44 : vector<8x128xf32>
    %46 = math.tanh %40 : vector<8x128xf32>
    %47 = vector.extract_strided_slice %45 {offsets = [0, 0], sizes = [8, 32], strides = [1, 1]} : vector<8x128xf32> to vector<8x32xf32>
    %48 = vector.extract_strided_slice %45 {offsets = [0, 32], sizes = [8, 32], strides = [1, 1]} : vector<8x128xf32> to vector<8x32xf32>
    %49 = vector.extract_strided_slice %46 {offsets = [0, 64], sizes = [8, 32], strides = [1, 1]} : vector<8x128xf32> to vector<8x32xf32>
    %50 = vector.extract_strided_slice %45 {offsets = [0, 96], sizes = [8, 32], strides = [1, 1]} : vector<8x128xf32> to vector<8x32xf32>
    %51 = arith.mulf %48, %35 : vector<8x32xf32>
    %52 = arith.mulf %47, %49 : vector<8x32xf32>
    %53 = arith.addf %51, %52 : vector<8x32xf32>
    %54 = math.tanh %53 : vector<8x32xf32>
    %55 = arith.mulf %50, %54 : vector<8x32xf32>
    %56 = vector.extract_strided_slice %15 {offsets = [16, 0], sizes = [8, 128], strides = [1, 1]} : vector<64x128xf32> to vector<8x128xf32>
    %cst_21 = arith.constant dense<0.000000e+00> : vector<8x128xf32>
    %57 = tpu.matmul %55, %17, %cst_21 {dimension_numbers = #tpu.dot_dimension_numbers<[1], [0], [0], [1], [0, 0, 1, 1], [], []>} : vector<8x32xf32>, vector<32x128xf32>, vector<8x128xf32> -> vector<8x128xf32>
    %58 = arith.addf %56, %57 : vector<8x128xf32>
    %59 = arith.negf %58 : vector<8x128xf32>
    %60 = math.exp %59 : vector<8x128xf32>
    %cst_22 = arith.constant 1.000000e+00 : f32
    %61 = vector.broadcast %cst_22 : f32 to vector<8x128xf32>
    %62 = arith.addf %61, %60 : vector<8x128xf32>
    %63 = arith.divf %61, %62 : vector<8x128xf32>
    %64 = math.tanh %58 : vector<8x128xf32>
    %65 = vector.extract_strided_slice %63 {offsets = [0, 0], sizes = [8, 32], strides = [1, 1]} : vector<8x128xf32> to vector<8x32xf32>
    %66 = vector.extract_strided_slice %63 {offsets = [0, 32], sizes = [8, 32], strides = [1, 1]} : vector<8x128xf32> to vector<8x32xf32>
    %67 = vector.extract_strided_slice %64 {offsets = [0, 64], sizes = [8, 32], strides = [1, 1]} : vector<8x128xf32> to vector<8x32xf32>
    %68 = vector.extract_strided_slice %63 {offsets = [0, 96], sizes = [8, 32], strides = [1, 1]} : vector<8x128xf32> to vector<8x32xf32>
    %69 = arith.mulf %66, %53 : vector<8x32xf32>
    %70 = arith.mulf %65, %67 : vector<8x32xf32>
    %71 = arith.addf %69, %70 : vector<8x32xf32>
    %72 = math.tanh %71 : vector<8x32xf32>
    %73 = arith.mulf %68, %72 : vector<8x32xf32>
    %74 = vector.extract_strided_slice %15 {offsets = [24, 0], sizes = [8, 128], strides = [1, 1]} : vector<64x128xf32> to vector<8x128xf32>
    %cst_23 = arith.constant dense<0.000000e+00> : vector<8x128xf32>
    %75 = tpu.matmul %73, %17, %cst_23 {dimension_numbers = #tpu.dot_dimension_numbers<[1], [0], [0], [1], [0, 0, 1, 1], [], []>} : vector<8x32xf32>, vector<32x128xf32>, vector<8x128xf32> -> vector<8x128xf32>
    %76 = arith.addf %74, %75 : vector<8x128xf32>
    %77 = arith.negf %76 : vector<8x128xf32>
    %78 = math.exp %77 : vector<8x128xf32>
    %cst_24 = arith.constant 1.000000e+00 : f32
    %79 = vector.broadcast %cst_24 : f32 to vector<8x128xf32>
    %80 = arith.addf %79, %78 : vector<8x128xf32>
    %81 = arith.divf %79, %80 : vector<8x128xf32>
    %82 = math.tanh %76 : vector<8x128xf32>
    %83 = vector.extract_strided_slice %81 {offsets = [0, 0], sizes = [8, 32], strides = [1, 1]} : vector<8x128xf32> to vector<8x32xf32>
    %84 = vector.extract_strided_slice %81 {offsets = [0, 32], sizes = [8, 32], strides = [1, 1]} : vector<8x128xf32> to vector<8x32xf32>
    %85 = vector.extract_strided_slice %82 {offsets = [0, 64], sizes = [8, 32], strides = [1, 1]} : vector<8x128xf32> to vector<8x32xf32>
    %86 = vector.extract_strided_slice %81 {offsets = [0, 96], sizes = [8, 32], strides = [1, 1]} : vector<8x128xf32> to vector<8x32xf32>
    %87 = arith.mulf %84, %71 : vector<8x32xf32>
    %88 = arith.mulf %83, %85 : vector<8x32xf32>
    %89 = arith.addf %87, %88 : vector<8x32xf32>
    %90 = math.tanh %89 : vector<8x32xf32>
    %91 = arith.mulf %86, %90 : vector<8x32xf32>
    %92 = vector.extract_strided_slice %15 {offsets = [32, 0], sizes = [8, 128], strides = [1, 1]} : vector<64x128xf32> to vector<8x128xf32>
    %cst_25 = arith.constant dense<0.000000e+00> : vector<8x128xf32>
    %93 = tpu.matmul %91, %17, %cst_25 {dimension_numbers = #tpu.dot_dimension_numbers<[1], [0], [0], [1], [0, 0, 1, 1], [], []>} : vector<8x32xf32>, vector<32x128xf32>, vector<8x128xf32> -> vector<8x128xf32>
    %94 = arith.addf %92, %93 : vector<8x128xf32>
    %95 = arith.negf %94 : vector<8x128xf32>
    %96 = math.exp %95 : vector<8x128xf32>
    %cst_26 = arith.constant 1.000000e+00 : f32
    %97 = vector.broadcast %cst_26 : f32 to vector<8x128xf32>
    %98 = arith.addf %97, %96 : vector<8x128xf32>
    %99 = arith.divf %97, %98 : vector<8x128xf32>
    %100 = math.tanh %94 : vector<8x128xf32>
    %101 = vector.extract_strided_slice %99 {offsets = [0, 0], sizes = [8, 32], strides = [1, 1]} : vector<8x128xf32> to vector<8x32xf32>
    %102 = vector.extract_strided_slice %99 {offsets = [0, 32], sizes = [8, 32], strides = [1, 1]} : vector<8x128xf32> to vector<8x32xf32>
    %103 = vector.extract_strided_slice %100 {offsets = [0, 64], sizes = [8, 32], strides = [1, 1]} : vector<8x128xf32> to vector<8x32xf32>
    %104 = vector.extract_strided_slice %99 {offsets = [0, 96], sizes = [8, 32], strides = [1, 1]} : vector<8x128xf32> to vector<8x32xf32>
    %105 = arith.mulf %102, %89 : vector<8x32xf32>
    %106 = arith.mulf %101, %103 : vector<8x32xf32>
    %107 = arith.addf %105, %106 : vector<8x32xf32>
    %108 = math.tanh %107 : vector<8x32xf32>
    %109 = arith.mulf %104, %108 : vector<8x32xf32>
    %110 = vector.extract_strided_slice %15 {offsets = [40, 0], sizes = [8, 128], strides = [1, 1]} : vector<64x128xf32> to vector<8x128xf32>
    %cst_27 = arith.constant dense<0.000000e+00> : vector<8x128xf32>
    %111 = tpu.matmul %109, %17, %cst_27 {dimension_numbers = #tpu.dot_dimension_numbers<[1], [0], [0], [1], [0, 0, 1, 1], [], []>} : vector<8x32xf32>, vector<32x128xf32>, vector<8x128xf32> -> vector<8x128xf32>
    %112 = arith.addf %110, %111 : vector<8x128xf32>
    %113 = arith.negf %112 : vector<8x128xf32>
    %114 = math.exp %113 : vector<8x128xf32>
    %cst_28 = arith.constant 1.000000e+00 : f32
    %115 = vector.broadcast %cst_28 : f32 to vector<8x128xf32>
    %116 = arith.addf %115, %114 : vector<8x128xf32>
    %117 = arith.divf %115, %116 : vector<8x128xf32>
    %118 = math.tanh %112 : vector<8x128xf32>
    %119 = vector.extract_strided_slice %117 {offsets = [0, 0], sizes = [8, 32], strides = [1, 1]} : vector<8x128xf32> to vector<8x32xf32>
    %120 = vector.extract_strided_slice %117 {offsets = [0, 32], sizes = [8, 32], strides = [1, 1]} : vector<8x128xf32> to vector<8x32xf32>
    %121 = vector.extract_strided_slice %118 {offsets = [0, 64], sizes = [8, 32], strides = [1, 1]} : vector<8x128xf32> to vector<8x32xf32>
    %122 = vector.extract_strided_slice %117 {offsets = [0, 96], sizes = [8, 32], strides = [1, 1]} : vector<8x128xf32> to vector<8x32xf32>
    %123 = arith.mulf %120, %107 : vector<8x32xf32>
    %124 = arith.mulf %119, %121 : vector<8x32xf32>
    %125 = arith.addf %123, %124 : vector<8x32xf32>
    %126 = math.tanh %125 : vector<8x32xf32>
    %127 = arith.mulf %122, %126 : vector<8x32xf32>
    %128 = vector.extract_strided_slice %15 {offsets = [48, 0], sizes = [8, 128], strides = [1, 1]} : vector<64x128xf32> to vector<8x128xf32>
    %cst_29 = arith.constant dense<0.000000e+00> : vector<8x128xf32>
    %129 = tpu.matmul %127, %17, %cst_29 {dimension_numbers = #tpu.dot_dimension_numbers<[1], [0], [0], [1], [0, 0, 1, 1], [], []>} : vector<8x32xf32>, vector<32x128xf32>, vector<8x128xf32> -> vector<8x128xf32>
    %130 = arith.addf %128, %129 : vector<8x128xf32>
    %131 = arith.negf %130 : vector<8x128xf32>
    %132 = math.exp %131 : vector<8x128xf32>
    %cst_30 = arith.constant 1.000000e+00 : f32
    %133 = vector.broadcast %cst_30 : f32 to vector<8x128xf32>
    %134 = arith.addf %133, %132 : vector<8x128xf32>
    %135 = arith.divf %133, %134 : vector<8x128xf32>
    %136 = math.tanh %130 : vector<8x128xf32>
    %137 = vector.extract_strided_slice %135 {offsets = [0, 0], sizes = [8, 32], strides = [1, 1]} : vector<8x128xf32> to vector<8x32xf32>
    %138 = vector.extract_strided_slice %135 {offsets = [0, 32], sizes = [8, 32], strides = [1, 1]} : vector<8x128xf32> to vector<8x32xf32>
    %139 = vector.extract_strided_slice %136 {offsets = [0, 64], sizes = [8, 32], strides = [1, 1]} : vector<8x128xf32> to vector<8x32xf32>
    %140 = vector.extract_strided_slice %135 {offsets = [0, 96], sizes = [8, 32], strides = [1, 1]} : vector<8x128xf32> to vector<8x32xf32>
    %141 = arith.mulf %138, %125 : vector<8x32xf32>
    %142 = arith.mulf %137, %139 : vector<8x32xf32>
    %143 = arith.addf %141, %142 : vector<8x32xf32>
    %144 = math.tanh %143 : vector<8x32xf32>
    %145 = arith.mulf %140, %144 : vector<8x32xf32>
    %146 = vector.extract_strided_slice %15 {offsets = [56, 0], sizes = [8, 128], strides = [1, 1]} : vector<64x128xf32> to vector<8x128xf32>
    %cst_31 = arith.constant dense<0.000000e+00> : vector<8x128xf32>
    %147 = tpu.matmul %145, %17, %cst_31 {dimension_numbers = #tpu.dot_dimension_numbers<[1], [0], [0], [1], [0, 0, 1, 1], [], []>} : vector<8x32xf32>, vector<32x128xf32>, vector<8x128xf32> -> vector<8x128xf32>
    %148 = arith.addf %146, %147 : vector<8x128xf32>
    %149 = arith.negf %148 : vector<8x128xf32>
    %150 = math.exp %149 : vector<8x128xf32>
    %cst_32 = arith.constant 1.000000e+00 : f32
    %151 = vector.broadcast %cst_32 : f32 to vector<8x128xf32>
    %152 = arith.addf %151, %150 : vector<8x128xf32>
    %153 = arith.divf %151, %152 : vector<8x128xf32>
    %154 = math.tanh %148 : vector<8x128xf32>
    %155 = vector.extract_strided_slice %153 {offsets = [0, 0], sizes = [8, 32], strides = [1, 1]} : vector<8x128xf32> to vector<8x32xf32>
    %156 = vector.extract_strided_slice %153 {offsets = [0, 32], sizes = [8, 32], strides = [1, 1]} : vector<8x128xf32> to vector<8x32xf32>
    %157 = vector.extract_strided_slice %154 {offsets = [0, 64], sizes = [8, 32], strides = [1, 1]} : vector<8x128xf32> to vector<8x32xf32>
    %158 = vector.extract_strided_slice %153 {offsets = [0, 96], sizes = [8, 32], strides = [1, 1]} : vector<8x128xf32> to vector<8x32xf32>
    %159 = arith.mulf %156, %143 : vector<8x32xf32>
    %160 = arith.mulf %155, %157 : vector<8x32xf32>
    %161 = arith.addf %159, %160 : vector<8x32xf32>
    %162 = math.tanh %161 : vector<8x32xf32>
    %163 = arith.mulf %158, %162 : vector<8x32xf32>
    %164 = tpu.concatenate %37, %55, %73, %91, %109, %127, %145, %163 in 0 : vector<8x32xf32>, vector<8x32xf32>, vector<8x32xf32>, vector<8x32xf32>, vector<8x32xf32>, vector<8x32xf32>, vector<8x32xf32>, vector<8x32xf32> -> vector<64x32xf32>
    %c1 = arith.constant 1 : index
    %c0_33 = arith.constant 0 : index
    %c0_34 = arith.constant 0 : index
    %165 = vector.load %arg2[%c1, %c0_33, %c0_34] : memref<2x32x128xf32, #tpu.memory_space<vmem>>, vector<1x32x128xf32>
    %166 = vector.shape_cast %165 : vector<1x32x128xf32> to vector<32x128xf32>
    %cst_35 = arith.constant dense<0.000000e+00> : vector<64x128xf32>
    %167 = tpu.matmul %164, %166, %cst_35 {dimension_numbers = #tpu.dot_dimension_numbers<[1], [0], [0], [1], [0, 0, 1, 1], [], []>} : vector<64x32xf32>, vector<32x128xf32>, vector<64x128xf32> -> vector<64x128xf32>
    %c1_36 = arith.constant 1 : index
    %c0_37 = arith.constant 0 : index
    %c0_38 = arith.constant 0 : index
    %168 = vector.load %arg4[%c1_36, %c0_37, %c0_38] : memref<2x1x128xf32, #tpu.memory_space<vmem>>, vector<1x1x128xf32>
    %169 = vector.shape_cast %168 : vector<1x1x128xf32> to vector<1x128xf32>
    %170 = vector.broadcast %169 : vector<1x128xf32> to vector<64x128xf32>
    %171 = arith.addf %167, %170 : vector<64x128xf32>
    %c1_39 = arith.constant 1 : index
    %c0_40 = arith.constant 0 : index
    %c0_41 = arith.constant 0 : index
    %172 = vector.load %arg3[%c1_39, %c0_40, %c0_41] : memref<2x32x128xf32, #tpu.memory_space<vmem>>, vector<1x32x128xf32>
    %173 = vector.shape_cast %172 : vector<1x32x128xf32> to vector<32x128xf32>
    %cst_42 = arith.constant 0.000000e+00 : f32
    %174 = vector.broadcast %cst_42 : f32 to vector<8x32xf32>
    %cst_43 = arith.constant 0.000000e+00 : f32
    %175 = vector.broadcast %cst_43 : f32 to vector<8x32xf32>
    %176 = vector.extract_strided_slice %171 {offsets = [0, 0], sizes = [8, 128], strides = [1, 1]} : vector<64x128xf32> to vector<8x128xf32>
    %cst_44 = arith.constant dense<0.000000e+00> : vector<8x128xf32>
    %177 = tpu.matmul %174, %173, %cst_44 {dimension_numbers = #tpu.dot_dimension_numbers<[1], [0], [0], [1], [0, 0, 1, 1], [], []>} : vector<8x32xf32>, vector<32x128xf32>, vector<8x128xf32> -> vector<8x128xf32>
    %178 = arith.addf %176, %177 : vector<8x128xf32>
    %179 = arith.negf %178 : vector<8x128xf32>
    %180 = math.exp %179 : vector<8x128xf32>
    %cst_45 = arith.constant 1.000000e+00 : f32
    %181 = vector.broadcast %cst_45 : f32 to vector<8x128xf32>
    %182 = arith.addf %181, %180 : vector<8x128xf32>
    %183 = arith.divf %181, %182 : vector<8x128xf32>
    %184 = math.tanh %178 : vector<8x128xf32>
    %185 = vector.extract_strided_slice %183 {offsets = [0, 0], sizes = [8, 32], strides = [1, 1]} : vector<8x128xf32> to vector<8x32xf32>
    %186 = vector.extract_strided_slice %183 {offsets = [0, 32], sizes = [8, 32], strides = [1, 1]} : vector<8x128xf32> to vector<8x32xf32>
    %187 = vector.extract_strided_slice %184 {offsets = [0, 64], sizes = [8, 32], strides = [1, 1]} : vector<8x128xf32> to vector<8x32xf32>
    %188 = vector.extract_strided_slice %183 {offsets = [0, 96], sizes = [8, 32], strides = [1, 1]} : vector<8x128xf32> to vector<8x32xf32>
    %189 = arith.mulf %186, %175 : vector<8x32xf32>
    %190 = arith.mulf %185, %187 : vector<8x32xf32>
    %191 = arith.addf %189, %190 : vector<8x32xf32>
    %192 = math.tanh %191 : vector<8x32xf32>
    %193 = arith.mulf %188, %192 : vector<8x32xf32>
    %194 = vector.extract_strided_slice %171 {offsets = [8, 0], sizes = [8, 128], strides = [1, 1]} : vector<64x128xf32> to vector<8x128xf32>
    %cst_46 = arith.constant dense<0.000000e+00> : vector<8x128xf32>
    %195 = tpu.matmul %193, %173, %cst_46 {dimension_numbers = #tpu.dot_dimension_numbers<[1], [0], [0], [1], [0, 0, 1, 1], [], []>} : vector<8x32xf32>, vector<32x128xf32>, vector<8x128xf32> -> vector<8x128xf32>
    %196 = arith.addf %194, %195 : vector<8x128xf32>
    %197 = arith.negf %196 : vector<8x128xf32>
    %198 = math.exp %197 : vector<8x128xf32>
    %cst_47 = arith.constant 1.000000e+00 : f32
    %199 = vector.broadcast %cst_47 : f32 to vector<8x128xf32>
    %200 = arith.addf %199, %198 : vector<8x128xf32>
    %201 = arith.divf %199, %200 : vector<8x128xf32>
    %202 = math.tanh %196 : vector<8x128xf32>
    %203 = vector.extract_strided_slice %201 {offsets = [0, 0], sizes = [8, 32], strides = [1, 1]} : vector<8x128xf32> to vector<8x32xf32>
    %204 = vector.extract_strided_slice %201 {offsets = [0, 32], sizes = [8, 32], strides = [1, 1]} : vector<8x128xf32> to vector<8x32xf32>
    %205 = vector.extract_strided_slice %202 {offsets = [0, 64], sizes = [8, 32], strides = [1, 1]} : vector<8x128xf32> to vector<8x32xf32>
    %206 = vector.extract_strided_slice %201 {offsets = [0, 96], sizes = [8, 32], strides = [1, 1]} : vector<8x128xf32> to vector<8x32xf32>
    %207 = arith.mulf %204, %191 : vector<8x32xf32>
    %208 = arith.mulf %203, %205 : vector<8x32xf32>
    %209 = arith.addf %207, %208 : vector<8x32xf32>
    %210 = math.tanh %209 : vector<8x32xf32>
    %211 = arith.mulf %206, %210 : vector<8x32xf32>
    %212 = vector.extract_strided_slice %171 {offsets = [16, 0], sizes = [8, 128], strides = [1, 1]} : vector<64x128xf32> to vector<8x128xf32>
    %cst_48 = arith.constant dense<0.000000e+00> : vector<8x128xf32>
    %213 = tpu.matmul %211, %173, %cst_48 {dimension_numbers = #tpu.dot_dimension_numbers<[1], [0], [0], [1], [0, 0, 1, 1], [], []>} : vector<8x32xf32>, vector<32x128xf32>, vector<8x128xf32> -> vector<8x128xf32>
    %214 = arith.addf %212, %213 : vector<8x128xf32>
    %215 = arith.negf %214 : vector<8x128xf32>
    %216 = math.exp %215 : vector<8x128xf32>
    %cst_49 = arith.constant 1.000000e+00 : f32
    %217 = vector.broadcast %cst_49 : f32 to vector<8x128xf32>
    %218 = arith.addf %217, %216 : vector<8x128xf32>
    %219 = arith.divf %217, %218 : vector<8x128xf32>
    %220 = math.tanh %214 : vector<8x128xf32>
    %221 = vector.extract_strided_slice %219 {offsets = [0, 0], sizes = [8, 32], strides = [1, 1]} : vector<8x128xf32> to vector<8x32xf32>
    %222 = vector.extract_strided_slice %219 {offsets = [0, 32], sizes = [8, 32], strides = [1, 1]} : vector<8x128xf32> to vector<8x32xf32>
    %223 = vector.extract_strided_slice %220 {offsets = [0, 64], sizes = [8, 32], strides = [1, 1]} : vector<8x128xf32> to vector<8x32xf32>
    %224 = vector.extract_strided_slice %219 {offsets = [0, 96], sizes = [8, 32], strides = [1, 1]} : vector<8x128xf32> to vector<8x32xf32>
    %225 = arith.mulf %222, %209 : vector<8x32xf32>
    %226 = arith.mulf %221, %223 : vector<8x32xf32>
    %227 = arith.addf %225, %226 : vector<8x32xf32>
    %228 = math.tanh %227 : vector<8x32xf32>
    %229 = arith.mulf %224, %228 : vector<8x32xf32>
    %230 = vector.extract_strided_slice %171 {offsets = [24, 0], sizes = [8, 128], strides = [1, 1]} : vector<64x128xf32> to vector<8x128xf32>
    %cst_50 = arith.constant dense<0.000000e+00> : vector<8x128xf32>
    %231 = tpu.matmul %229, %173, %cst_50 {dimension_numbers = #tpu.dot_dimension_numbers<[1], [0], [0], [1], [0, 0, 1, 1], [], []>} : vector<8x32xf32>, vector<32x128xf32>, vector<8x128xf32> -> vector<8x128xf32>
    %232 = arith.addf %230, %231 : vector<8x128xf32>
    %233 = arith.negf %232 : vector<8x128xf32>
    %234 = math.exp %233 : vector<8x128xf32>
    %cst_51 = arith.constant 1.000000e+00 : f32
    %235 = vector.broadcast %cst_51 : f32 to vector<8x128xf32>
    %236 = arith.addf %235, %234 : vector<8x128xf32>
    %237 = arith.divf %235, %236 : vector<8x128xf32>
    %238 = math.tanh %232 : vector<8x128xf32>
    %239 = vector.extract_strided_slice %237 {offsets = [0, 0], sizes = [8, 32], strides = [1, 1]} : vector<8x128xf32> to vector<8x32xf32>
    %240 = vector.extract_strided_slice %237 {offsets = [0, 32], sizes = [8, 32], strides = [1, 1]} : vector<8x128xf32> to vector<8x32xf32>
    %241 = vector.extract_strided_slice %238 {offsets = [0, 64], sizes = [8, 32], strides = [1, 1]} : vector<8x128xf32> to vector<8x32xf32>
    %242 = vector.extract_strided_slice %237 {offsets = [0, 96], sizes = [8, 32], strides = [1, 1]} : vector<8x128xf32> to vector<8x32xf32>
    %243 = arith.mulf %240, %227 : vector<8x32xf32>
    %244 = arith.mulf %239, %241 : vector<8x32xf32>
    %245 = arith.addf %243, %244 : vector<8x32xf32>
    %246 = math.tanh %245 : vector<8x32xf32>
    %247 = arith.mulf %242, %246 : vector<8x32xf32>
    %248 = vector.extract_strided_slice %171 {offsets = [32, 0], sizes = [8, 128], strides = [1, 1]} : vector<64x128xf32> to vector<8x128xf32>
    %cst_52 = arith.constant dense<0.000000e+00> : vector<8x128xf32>
    %249 = tpu.matmul %247, %173, %cst_52 {dimension_numbers = #tpu.dot_dimension_numbers<[1], [0], [0], [1], [0, 0, 1, 1], [], []>} : vector<8x32xf32>, vector<32x128xf32>, vector<8x128xf32> -> vector<8x128xf32>
    %250 = arith.addf %248, %249 : vector<8x128xf32>
    %251 = arith.negf %250 : vector<8x128xf32>
    %252 = math.exp %251 : vector<8x128xf32>
    %cst_53 = arith.constant 1.000000e+00 : f32
    %253 = vector.broadcast %cst_53 : f32 to vector<8x128xf32>
    %254 = arith.addf %253, %252 : vector<8x128xf32>
    %255 = arith.divf %253, %254 : vector<8x128xf32>
    %256 = math.tanh %250 : vector<8x128xf32>
    %257 = vector.extract_strided_slice %255 {offsets = [0, 0], sizes = [8, 32], strides = [1, 1]} : vector<8x128xf32> to vector<8x32xf32>
    %258 = vector.extract_strided_slice %255 {offsets = [0, 32], sizes = [8, 32], strides = [1, 1]} : vector<8x128xf32> to vector<8x32xf32>
    %259 = vector.extract_strided_slice %256 {offsets = [0, 64], sizes = [8, 32], strides = [1, 1]} : vector<8x128xf32> to vector<8x32xf32>
    %260 = vector.extract_strided_slice %255 {offsets = [0, 96], sizes = [8, 32], strides = [1, 1]} : vector<8x128xf32> to vector<8x32xf32>
    %261 = arith.mulf %258, %245 : vector<8x32xf32>
    %262 = arith.mulf %257, %259 : vector<8x32xf32>
    %263 = arith.addf %261, %262 : vector<8x32xf32>
    %264 = math.tanh %263 : vector<8x32xf32>
    %265 = arith.mulf %260, %264 : vector<8x32xf32>
    %266 = vector.extract_strided_slice %171 {offsets = [40, 0], sizes = [8, 128], strides = [1, 1]} : vector<64x128xf32> to vector<8x128xf32>
    %cst_54 = arith.constant dense<0.000000e+00> : vector<8x128xf32>
    %267 = tpu.matmul %265, %173, %cst_54 {dimension_numbers = #tpu.dot_dimension_numbers<[1], [0], [0], [1], [0, 0, 1, 1], [], []>} : vector<8x32xf32>, vector<32x128xf32>, vector<8x128xf32> -> vector<8x128xf32>
    %268 = arith.addf %266, %267 : vector<8x128xf32>
    %269 = arith.negf %268 : vector<8x128xf32>
    %270 = math.exp %269 : vector<8x128xf32>
    %cst_55 = arith.constant 1.000000e+00 : f32
    %271 = vector.broadcast %cst_55 : f32 to vector<8x128xf32>
    %272 = arith.addf %271, %270 : vector<8x128xf32>
    %273 = arith.divf %271, %272 : vector<8x128xf32>
    %274 = math.tanh %268 : vector<8x128xf32>
    %275 = vector.extract_strided_slice %273 {offsets = [0, 0], sizes = [8, 32], strides = [1, 1]} : vector<8x128xf32> to vector<8x32xf32>
    %276 = vector.extract_strided_slice %273 {offsets = [0, 32], sizes = [8, 32], strides = [1, 1]} : vector<8x128xf32> to vector<8x32xf32>
    %277 = vector.extract_strided_slice %274 {offsets = [0, 64], sizes = [8, 32], strides = [1, 1]} : vector<8x128xf32> to vector<8x32xf32>
    %278 = vector.extract_strided_slice %273 {offsets = [0, 96], sizes = [8, 32], strides = [1, 1]} : vector<8x128xf32> to vector<8x32xf32>
    %279 = arith.mulf %276, %263 : vector<8x32xf32>
    %280 = arith.mulf %275, %277 : vector<8x32xf32>
    %281 = arith.addf %279, %280 : vector<8x32xf32>
    %282 = math.tanh %281 : vector<8x32xf32>
    %283 = arith.mulf %278, %282 : vector<8x32xf32>
    %284 = vector.extract_strided_slice %171 {offsets = [48, 0], sizes = [8, 128], strides = [1, 1]} : vector<64x128xf32> to vector<8x128xf32>
    %cst_56 = arith.constant dense<0.000000e+00> : vector<8x128xf32>
    %285 = tpu.matmul %283, %173, %cst_56 {dimension_numbers = #tpu.dot_dimension_numbers<[1], [0], [0], [1], [0, 0, 1, 1], [], []>} : vector<8x32xf32>, vector<32x128xf32>, vector<8x128xf32> -> vector<8x128xf32>
    %286 = arith.addf %284, %285 : vector<8x128xf32>
    %287 = arith.negf %286 : vector<8x128xf32>
    %288 = math.exp %287 : vector<8x128xf32>
    %cst_57 = arith.constant 1.000000e+00 : f32
    %289 = vector.broadcast %cst_57 : f32 to vector<8x128xf32>
    %290 = arith.addf %289, %288 : vector<8x128xf32>
    %291 = arith.divf %289, %290 : vector<8x128xf32>
    %292 = math.tanh %286 : vector<8x128xf32>
    %293 = vector.extract_strided_slice %291 {offsets = [0, 0], sizes = [8, 32], strides = [1, 1]} : vector<8x128xf32> to vector<8x32xf32>
    %294 = vector.extract_strided_slice %291 {offsets = [0, 32], sizes = [8, 32], strides = [1, 1]} : vector<8x128xf32> to vector<8x32xf32>
    %295 = vector.extract_strided_slice %292 {offsets = [0, 64], sizes = [8, 32], strides = [1, 1]} : vector<8x128xf32> to vector<8x32xf32>
    %296 = vector.extract_strided_slice %291 {offsets = [0, 96], sizes = [8, 32], strides = [1, 1]} : vector<8x128xf32> to vector<8x32xf32>
    %297 = arith.mulf %294, %281 : vector<8x32xf32>
    %298 = arith.mulf %293, %295 : vector<8x32xf32>
    %299 = arith.addf %297, %298 : vector<8x32xf32>
    %300 = math.tanh %299 : vector<8x32xf32>
    %301 = arith.mulf %296, %300 : vector<8x32xf32>
    %302 = vector.extract_strided_slice %171 {offsets = [56, 0], sizes = [8, 128], strides = [1, 1]} : vector<64x128xf32> to vector<8x128xf32>
    %cst_58 = arith.constant dense<0.000000e+00> : vector<8x128xf32>
    %303 = tpu.matmul %301, %173, %cst_58 {dimension_numbers = #tpu.dot_dimension_numbers<[1], [0], [0], [1], [0, 0, 1, 1], [], []>} : vector<8x32xf32>, vector<32x128xf32>, vector<8x128xf32> -> vector<8x128xf32>
    %304 = arith.addf %302, %303 : vector<8x128xf32>
    %305 = arith.negf %304 : vector<8x128xf32>
    %306 = math.exp %305 : vector<8x128xf32>
    %cst_59 = arith.constant 1.000000e+00 : f32
    %307 = vector.broadcast %cst_59 : f32 to vector<8x128xf32>
    %308 = arith.addf %307, %306 : vector<8x128xf32>
    %309 = arith.divf %307, %308 : vector<8x128xf32>
    %310 = math.tanh %304 : vector<8x128xf32>
    %311 = vector.extract_strided_slice %309 {offsets = [0, 0], sizes = [8, 32], strides = [1, 1]} : vector<8x128xf32> to vector<8x32xf32>
    %312 = vector.extract_strided_slice %309 {offsets = [0, 32], sizes = [8, 32], strides = [1, 1]} : vector<8x128xf32> to vector<8x32xf32>
    %313 = vector.extract_strided_slice %310 {offsets = [0, 64], sizes = [8, 32], strides = [1, 1]} : vector<8x128xf32> to vector<8x32xf32>
    %314 = vector.extract_strided_slice %309 {offsets = [0, 96], sizes = [8, 32], strides = [1, 1]} : vector<8x128xf32> to vector<8x32xf32>
    %315 = arith.mulf %312, %299 : vector<8x32xf32>
    %316 = arith.mulf %311, %313 : vector<8x32xf32>
    %317 = arith.addf %315, %316 : vector<8x32xf32>
    %318 = math.tanh %317 : vector<8x32xf32>
    %319 = arith.mulf %314, %318 : vector<8x32xf32>
    %320 = tpu.concatenate %193, %211, %229, %247, %265, %283, %301, %319 in 0 : vector<8x32xf32>, vector<8x32xf32>, vector<8x32xf32>, vector<8x32xf32>, vector<8x32xf32>, vector<8x32xf32>, vector<8x32xf32>, vector<8x32xf32> -> vector<64x32xf32>
    %c0_60 = arith.constant 0 : index
    %c0_61 = arith.constant 0 : index
    %321 = vector.load %arg5[%c0_60, %c0_61] : memref<32x128xf32, #tpu.memory_space<vmem>>, vector<32x128xf32>
    %cst_62 = arith.constant dense<0.000000e+00> : vector<64x128xf32>
    %322 = tpu.matmul %320, %321, %cst_62 {dimension_numbers = #tpu.dot_dimension_numbers<[1], [0], [0], [1], [0, 0, 1, 1], [], []>} : vector<64x32xf32>, vector<32x128xf32>, vector<64x128xf32> -> vector<64x128xf32>
    %c0_63 = arith.constant 0 : index
    %c0_64 = arith.constant 0 : index
    %323 = vector.load %arg6[%c0_63, %c0_64] : memref<1x128xf32, #tpu.memory_space<vmem>>, vector<1x128xf32>
    %324 = vector.broadcast %323 : vector<1x128xf32> to vector<64x128xf32>
    %325 = arith.addf %322, %324 : vector<64x128xf32>
    %c0_65 = arith.constant 0 : index
    %c0_66 = arith.constant 0 : index
    %326 = vector.load %arg7[%c0_65, %c0_66] : memref<64x128xf32, #tpu.memory_space<vmem>>, vector<64x128xf32>
    tpu.vector_store %arg7[%c0_65, %c0_66], %325 {strides = array<i32>} : memref<64x128xf32, #tpu.memory_space<vmem>>, vector<64x128xf32>,
    return
  }
}

</mosaic_0001>

<llo_original>
// kernel: forward.1
$region0: #{forward.1}
  #allocation0 [shape = 'u32[]', space=smem, size = 0x4, offset = 0x4, fixed_abs, tag = 'smem constant byte address 0x4 - core index']
  #allocation1 [shape = 'u32[144,128]{1,0:T(1,128)}', space=vmem, size = 0x12000, scoped, tag = 'internal scratch']
  %s0 = inlined_call_operand.vmem [shape: s32[64,1], index: 0, kind: input, shape index: {}]
  %s1 = inlined_call_operand.hbm [shape: f32[8,32], index: 1, kind: input, shape index: {}]
  %s2 = inlined_call_operand.hbm [shape: f32[2,32,128], index: 2, kind: input, shape index: {}]
  %s3 = inlined_call_operand.vmem [shape: f32[2,32,128], index: 3, kind: input, shape index: {}]
  %s4 = inlined_call_operand.vmem [shape: f32[2,1,128], index: 4, kind: input, shape index: {}]
  %s5 = inlined_call_operand.vmem [shape: f32[32,128], index: 5, kind: input, shape index: {}]
  %s6 = inlined_call_operand.vmem [shape: f32[1,128], index: 6, kind: input, shape index: {}]
  %s7 = inlined_call_operand.vmem [shape: f32[64,128], index: 7, kind: output, shape index: {}]
  %s8 = sld [smem:[#allocation0]]
  $region46: #{forward.1} parent=0
    _
  %s10 = ssub.s32 1, %s8
  %s11 = scalar_select 0, %s10, %s8
  $region1: #{forward.1} parent=0
    #allocation2 [shape = 'u8[4096]{0}', space=vmem, size = 0x1000, scoped, tag = 'input window, operand 1, single buffered']
    #allocation3 [shape = 's32[1]{0}', space=sflag, size = 0x4, scoped, tag = 'scoped memory for forward.1']
    #allocation4 [shape = 'u8[32768]{0}', space=vmem, size = 0x8000, scoped, tag = 'input window, operand 2, single buffered']
    #allocation5 [shape = 's32[1]{0}', space=sflag, size = 0x4, scoped, tag = 'scoped memory for forward.1']
    %12 = vsyncpa [#allocation3], 0
    %13 = vsyncpa [#allocation5], 0
    // Predicated region
    $region2: #{forward.1} parent=1 // pred_check
      _
    $region3: #{forward.1} parent=1 // pred_check_branch
      %15 = sbr.rel (0) target = $region5
    $region4: #{forward.1} parent=1 // pred_region
      _
    $region5: #{forward.1} parent=1 // pred_fallthru
      _
    // Predicated region
    $region6: #{forward.1} parent=1 // pred_check
      _
    $region7: #{forward.1} parent=1 // pred_check_branch
      %17 = sbr.rel (0) target = $region9
    $region8: #{forward.1} parent=1 // pred_region
      %s19 = ssub.s32 128, 128
      %20 = vsyncadd [#allocation3], %s19
      %s22 = sshll.u32 [#allocation2], 4
      %s23 = int_to_ptr.vmem [resolvable:$true] %s22
      %25 = dma.hbm_to_vmem [thread:$0]  %s1, 128, %s23, [#allocation3]
    $region9: #{forward.1} parent=1 // pred_fallthru
      _
    // Predicated region
    $region10: #{forward.1} parent=1 // pred_check
      _
    $region11: #{forward.1} parent=1 // pred_check_branch
      %27 = sbr.rel (0) target = $region13
    $region12: #{forward.1} parent=1 // pred_region
      %s29 = ssub.s32 1024, 1024
      %30 = vsyncadd [#allocation5], %s29
      %s31 = sshll.u32 [#allocation4], 4
      %s32 = int_to_ptr.vmem [resolvable:$true] %s31
      %37 = dma.hbm_to_vmem [thread:$0]  %s2, 1024, %s32, [#allocation5], 128, 128, 8
    $region13: #{forward.1} parent=1 // pred_fallthru
      _
    // Predicated region
    $region14: #{forward.1} parent=1 // pred_check
      _
    $region15: #{forward.1} parent=1 // pred_check_branch
      %39 = sbr.rel (0) target = $region17
    $region16: #{forward.1} parent=1 // pred_region
      _
    $region17: #{forward.1} parent=1 // pred_fallthru
      _
    // Predicated region
    $region18: #{forward.1} parent=1 // pred_check
      _
    $region19: #{forward.1} parent=1 // pred_check_branch
      %41 = sbr.rel (0) target = $region21
    $region20: #{forward.1} parent=1 // pred_region
      _
    $region21: #{forward.1} parent=1 // pred_fallthru
      _
    // Predicated region
    $region22: #{forward.1} parent=1 // pred_check
      _
    $region23: #{forward.1} parent=1 // pred_check_branch
      %43 = sbr.rel (0) target = $region25
    $region24: #{forward.1} parent=1 // pred_region
      _
    $region25: #{forward.1} parent=1 // pred_fallthru
      _
    // Predicated region
    $region26: #{forward.1} parent=1 // pred_check
      _
    $region27: #{forward.1} parent=1 // pred_check_branch
      %45 = sbr.rel (0) target = $region29
    $region28: #{forward.1} parent=1 // pred_region
      _
    $region29: #{forward.1} parent=1 // pred_fallthru
      _
    // Predicated region
    $region30: #{forward.1} parent=1 // pred_check
      _
    $region31: #{forward.1} parent=1 // pred_check_branch
      %47 = sbr.rel (0) target = $region33
    $region32: #{forward.1} parent=1 // pred_region
      %48 = dma.done [#allocation3], 128
    $region33: #{forward.1} parent=1 // pred_fallthru
      _
    // Predicated region
    $region34: #{forward.1} parent=1 // pred_check
      _
    $region35: #{forward.1} parent=1 // pred_check_branch
      %50 = sbr.rel (0) target = $region37
    $region36: #{forward.1} parent=1 // pred_region
      %51 = dma.done [#allocation5], 1024
    $region37: #{forward.1} parent=1 // pred_fallthru
      _
    %v52 = vld [vmem:[%s0] sm:$0xff]
    %v53 = vld [vmem:[%s0 + $0x8] sm:$0xff]
    %v54 = vld [vmem:[%s0 + $0x10] sm:$0xff]
    %v55 = vld [vmem:[%s0 + $0x18] sm:$0xff]
    %v56 = vld [vmem:[%s0 + $0x20] sm:$0xff]
    %v57 = vld [vmem:[%s0 + $0x28] sm:$0xff]
    %v58 = vld [vmem:[%s0 + $0x30] sm:$0xff]
    %v59 = vld [vmem:[%s0 + $0x38] sm:$0xff]
    %v60 = vlaneseq
    %v61 = vand.u32 %v60, 127
    %62 = vset.pattern.permute.xlu0 0
    %63 = vperm.xlu0 %62, %v52
    %v64 = vpop.permute.xlu0 %63
    %65 = vset.pattern.permute.xlu0 0
    %66 = vperm.xlu0 %65, %v53
    %v67 = vpop.permute.xlu0 %66
    %68 = vset.pattern.permute.xlu0 0
    %69 = vperm.xlu0 %68, %v54
    %v70 = vpop.permute.xlu0 %69
    %71 = vset.pattern.permute.xlu0 0
    %72 = vperm.xlu0 %71, %v55
    %v73 = vpop.permute.xlu0 %72
    %74 = vset.pattern.permute.xlu0 0
    %75 = vperm.xlu0 %74, %v56
    %v76 = vpop.permute.xlu0 %75
    %77 = vset.pattern.permute.xlu0 0
    %78 = vperm.xlu0 %77, %v57
    %v79 = vpop.permute.xlu0 %78
    %80 = vset.pattern.permute.xlu0 0
    %81 = vperm.xlu0 %80, %v58
    %v82 = vpop.permute.xlu0 %81
    %83 = vset.pattern.permute.xlu0 0
    %84 = vperm.xlu0 %83, %v59
    %v85 = vpop.permute.xlu0 %84
    %vm86 = vcmp.eq.s32.totalorder %v64, %v61
    %vm87 = vcmp.eq.s32.totalorder %v67, %v61
    %vm88 = vcmp.eq.s32.totalorder %v70, %v61
    %vm89 = vcmp.eq.s32.totalorder %v73, %v61
    %vm90 = vcmp.eq.s32.totalorder %v76, %v61
    %vm91 = vcmp.eq.s32.totalorder %v79, %v61
    %vm92 = vcmp.eq.s32.totalorder %v82, %v61
    %vm93 = vcmp.eq.s32.totalorder %v85, %v61
    %v94 = vsel %vm86, 1.0, 0.0
    %v95 = vsel %vm87, 1.0, 0.0
    %v96 = vsel %vm88, 1.0, 0.0
    %v97 = vsel %vm89, 1.0, 0.0
    %v98 = vsel %vm90, 1.0, 0.0
    %v99 = vsel %vm91, 1.0, 0.0
    %v100 = vsel %vm92, 1.0, 0.0
    %v101 = vsel %vm93, 1.0, 0.0
    %v102 = vld [vmem:[#allocation2] sm:$0xff]
    %vm103 = vcmask 64512
    %v105 = vsel %vm103, %v94, 0
    %v108 = vsel %vm103, %v95, 0
    %v111 = vsel %vm103, %v96, 0
    %v114 = vsel %vm103, %v97, 0
    %v117 = vsel %vm103, %v98, 0
    %v120 = vsel %vm103, %v99, 0
    %v123 = vsel %vm103, %v100, 0
    %v126 = vsel %vm103, %v101, 0
    %128 = vmatprep.subr.mxu0 0.0
    %129 = vmatpush1.msra.mxu0 %v102
    %130 = vmatprep.subr.mxu0 0.0
    %131 = vmatpush1.msra.mxu0 0.0
    %132 = vmatprep.subr.mxu0 0.0
    %133 = vmatpush1.msra.mxu0 0.0
    %134 = vmatprep.subr.mxu0 0.0
    %135 = vmatpush1.msra.mxu0 0.0
    %136 = vmatprep.subr.mxu0 0.0
    %137 = vmatpush1.msra.mxu0 0.0
    %138 = vmatprep.subr.mxu0 0.0
    %139 = vmatpush1.msra.mxu0 0.0
    %140 = vmatprep.subr.mxu0 0.0
    %141 = vmatpush1.msra.mxu0 0.0
    %142 = vmatprep.subr.mxu0 0.0
    %143 = vmatpush1.msra.mxu0 0.0
    %144 = vmatprep.subr.mxu0 0.0
    %145 = vmatpush1.msra.mxu0 0.0
    %146 = vmatprep.subr.mxu0 0.0
    %147 = vmatpush1.msra.mxu0 0.0
    %148 = vmatprep.subr.mxu0 0.0
    %149 = vmatpush1.msra.mxu0 0.0
    %150 = vmatprep.subr.mxu0 0.0
    %151 = vmatpush1.msra.mxu0 0.0
    %152 = vmatprep.subr.mxu0 0.0
    %153 = vmatpush1.msra.mxu0 0.0
    %154 = vmatprep.subr.mxu0 0.0
    %155 = vmatpush1.msra.mxu0 0.0
    %156 = vmatprep.subr.mxu0 0.0
    %157 = vmatpush1.msra.mxu0 0.0
    %158 = vmatprep.subr.mxu0 0.0
    %159 = vmatpush1.msra.mxu0 0.0
    %160 = vmatprep.subr.mxu0 0.0
    %161 = vmatpush1.msra.mxu0 0.0
    %162 = vmatprep.subr.mxu0 0.0
    %163 = vmatpush1.msra.mxu0 0.0
    %164 = vmatprep.subr.mxu0 0.0
    %165 = vmatpush1.msra.mxu0 0.0
    %166 = vmatprep.subr.mxu0 0.0
    %167 = vmatpush1.msra.mxu0 0.0
    %168 = vmatprep.subr.mxu0 0.0
    %169 = vmatpush1.msra.mxu0 0.0
    %170 = vmatprep.subr.mxu0 0.0
    %171 = vmatpush1.msra.mxu0 0.0
    %172 = vmatprep.subr.mxu0 0.0
    %173 = vmatpush1.msra.mxu0 0.0
    %174 = vmatprep.subr.mxu0 0.0
    %175 = vmatpush1.msra.mxu0 0.0
    %176 = vmatprep.subr.mxu0 0.0
    %177 = vmatpush1.msra.mxu0 0.0
    %178 = vmatprep.subr.mxu0 0.0
    %179 = vmatpush1.msra.mxu0 0.0
    %180 = vmatprep.subr.mxu0 0.0
    %181 = vmatpush1.msra.mxu0 0.0
    %182 = vmatprep.subr.mxu0 0.0
    %183 = vmatpush1.msra.mxu0 0.0
    %184 = vmatprep.subr.mxu0 0.0
    %185 = vmatpush1.msra.mxu0 0.0
    %186 = vmatprep.subr.mxu0 0.0
    %187 = vmatpush1.msra.mxu0 0.0
    %188 = vmatprep.subr.mxu0 0.0
    %189 = vmatpush1.msra.mxu0 0.0
    %190 = vmatprep.subr.mxu0 0.0
    %191 = vmatpush1.msra.mxu0 0.0
    %192 = vmatprep.mubr.f32.mxu0 0.0
    %193 = vmatmul.mubr.f32.gmra.mrb[0].mxu0 %v105
    %v194 = vpop.f32.mrb[0].mxu0
    %v195 = vadd.f32 0.0, %v194
    %v196 = vpop.f32.mrb[0].mxu0
    %197 = vmatprep.mubr.f32.mxu0 0.0
    %198 = vmatmul.mubr.f32.gmra.mrb[0].mxu0 %v108
    %v199 = vpop.f32.mrb[0].mxu0
    %v200 = vadd.f32 0.0, %v199
    %v201 = vpop.f32.mrb[0].mxu0
    %202 = vmatprep.mubr.f32.mxu0 0.0
    %203 = vmatmul.mubr.f32.gmra.mrb[0].mxu0 %v111
    %v204 = vpop.f32.mrb[0].mxu0
    %v205 = vadd.f32 0.0, %v204
    %v206 = vpop.f32.mrb[0].mxu0
    %207 = vmatprep.mubr.f32.mxu0 0.0
    %208 = vmatmul.mubr.f32.gmra.mrb[0].mxu0 %v114
    %v209 = vpop.f32.mrb[0].mxu0
    %v210 = vadd.f32 0.0, %v209
    %v211 = vpop.f32.mrb[0].mxu0
    %212 = vmatprep.mubr.f32.mxu0 0.0
    %213 = vmatmul.mubr.f32.gmra.mrb[0].mxu0 %v117
    %v214 = vpop.f32.mrb[0].mxu0
    %v215 = vadd.f32 0.0, %v214
    %v216 = vpop.f32.mrb[0].mxu0
    %217 = vmatprep.mubr.f32.mxu0 0.0
    %218 = vmatmul.mubr.f32.gmra.mrb[0].mxu0 %v120
    %v219 = vpop.f32.mrb[0].mxu0
    %v220 = vadd.f32 0.0, %v219
    %v221 = vpop.f32.mrb[0].mxu0
    %222 = vmatprep.mubr.f32.mxu0 0.0
    %223 = vmatmul.mubr.f32.gmra.mrb[0].mxu0 %v123
    %v224 = vpop.f32.mrb[0].mxu0
    %v225 = vadd.f32 0.0, %v224
    %v226 = vpop.f32.mrb[0].mxu0
    %227 = vmatprep.mubr.f32.mxu0 0.0
    %228 = vmatmul.mubr.f32.gmra.mrb[0].mxu0 %v126
    %v229 = vpop.f32.mrb[0].mxu0
    %v230 = vadd.f32 0.0, %v229
    %v231 = vpop.f32.mrb[0].mxu0
    %232 = vdwg.mxu0
    %v233 = vld [vmem:[#allocation4] sm:$0xff]
    %v234 = vld [vmem:[#allocation4 + $0x8] sm:$0xff]
    %v235 = vld [vmem:[#allocation4 + $0x10] sm:$0xff]
    %v236 = vld [vmem:[#allocation4 + $0x18] sm:$0xff]
    %v237 = vld [vmem:[%s4] sm:$0x1]
    %v239 = vlaneseq
    %v240 = vshrl.u32 %v239, 7
    %v241 = vsub.s32 0, %v240
    %v242 = vrot.slane %v237, %v241
    %vm244 = vcmask 261120
    %v246 = vsel %vm244, %v195, 0
    %v249 = vsel %vm244, %v200, 0
    %v252 = vsel %vm244, %v205, 0
    %v255 = vsel %vm244, %v210, 0
    %v258 = vsel %vm244, %v215, 0
    %v261 = vsel %vm244, %v220, 0
    %v264 = vsel %vm244, %v225, 0
    %v267 = vsel %vm244, %v230, 0
    %269 = vmatprep.subr.mxu0 0.0
    %270 = vmatpush1.msra.mxu0 %v233
    %271 = vmatprep.subr.mxu0 0.0
    %272 = vmatpush1.msra.mxu0 %v234
    %273 = vmatprep.subr.mxu0 0.0
    %274 = vmatpush1.msra.mxu0 %v235
    %275 = vmatprep.subr.mxu0 0.0
    %276 = vmatpush1.msra.mxu0 %v236
    %277 = vmatprep.subr.mxu0 0.0
    %278 = vmatpush1.msra.mxu0 0.0
    %279 = vmatprep.subr.mxu0 0.0
    %280 = vmatpush1.msra.mxu0 0.0
    %281 = vmatprep.subr.mxu0 0.0
    %282 = vmatpush1.msra.mxu0 0.0
    %283 = vmatprep.subr.mxu0 0.0
    %284 = vmatpush1.msra.mxu0 0.0
    %285 = vmatprep.subr.mxu0 0.0
    %286 = vmatpush1.msra.mxu0 0.0
    %287 = vmatprep.subr.mxu0 0.0
    %288 = vmatpush1.msra.mxu0 0.0
    %289 = vmatprep.subr.mxu0 0.0
    %290 = vmatpush1.msra.mxu0 0.0
    %291 = vmatprep.subr.mxu0 0.0
    %292 = vmatpush1.msra.mxu0 0.0
    %293 = vmatprep.subr.mxu0 0.0
    %294 = vmatpush1.msra.mxu0 0.0
    %295 = vmatprep.subr.mxu0 0.0
    %296 = vmatpush1.msra.mxu0 0.0
    %297 = vmatprep.subr.mxu0 0.0
    %298 = vmatpush1.msra.mxu0 0.0
    %299 = vmatprep.subr.mxu0 0.0
    %300 = vmatpush1.msra.mxu0 0.0
    %301 = vmatprep.subr.mxu0 0.0
    %302 = vmatpush1.msra.mxu0 0.0
    %303 = vmatprep.subr.mxu0 0.0
    %304 = vmatpush1.msra.mxu0 0.0
    %305 = vmatprep.subr.mxu0 0.0
    %306 = vmatpush1.msra.mxu0 0.0
    %307 = vmatprep.subr.mxu0 0.0
    %308 = vmatpush1.msra.mxu0 0.0
    %309 = vmatprep.subr.mxu0 0.0
    %310 = vmatpush1.msra.mxu0 0.0
    %311 = vmatprep.subr.mxu0 0.0
    %312 = vmatpush1.msra.mxu0 0.0
    %313 = vmatprep.subr.mxu0 0.0
    %314 = vmatpush1.msra.mxu0 0.0
    %315 = vmatprep.subr.mxu0 0.0
    %316 = vmatpush1.msra.mxu0 0.0
    %317 = vmatprep.subr.mxu0 0.0
    %318 = vmatpush1.msra.mxu0 0.0
    %319 = vmatprep.subr.mxu0 0.0
    %320 = vmatpush1.msra.mxu0 0.0
    %321 = vmatprep.subr.mxu0 0.0
    %322 = vmatpush1.msra.mxu0 0.0
    %323 = vmatprep.subr.mxu0 0.0
    %324 = vmatpush1.msra.mxu0 0.0
    %325 = vmatprep.subr.mxu0 0.0
    %326 = vmatpush1.msra.mxu0 0.0
    %327 = vmatprep.subr.mxu0 0.0
    %328 = vmatpush1.msra.mxu0 0.0
    %329 = vmatprep.subr.mxu0 0.0
    %330 = vmatpush1.msra.mxu0 0.0
    %331 = vmatprep.subr.mxu0 0.0
    %332 = vmatpush1.msra.mxu0 0.0
    %333 = vmatprep.mubr.f32.mxu0 0.0
    %334 = vmatmul.mubr.f32.gmra.mrb[0].mxu0 %v246
    %v335 = vpop.f32.mrb[0].mxu0
    %v336 = vadd.f32 %v242, %v335
    %v337 = vpop.f32.mrb[0].mxu0
    %338 = vmatprep.mubr.f32.mxu0 0.0
    %339 = vmatmul.mubr.f32.gmra.mrb[0].mxu0 %v249
    %v340 = vpop.f32.mrb[0].mxu0
    %v341 = vadd.f32 %v242, %v340
    %v342 = vpop.f32.mrb[0].mxu0
    %343 = vmatprep.mubr.f32.mxu0 0.0
    %344 = vmatmul.mubr.f32.gmra.mrb[0].mxu0 %v252
    %v345 = vpop.f32.mrb[0].mxu0
    %v346 = vadd.f32 %v242, %v345
    %v347 = vpop.f32.mrb[0].mxu0
    %348 = vmatprep.mubr.f32.mxu0 0.0
    %349 = vmatmul.mubr.f32.gmra.mrb[0].mxu0 %v255
    %v350 = vpop.f32.mrb[0].mxu0
    %v351 = vadd.f32 %v242, %v350
    %v352 = vpop.f32.mrb[0].mxu0
    %353 = vmatprep.mubr.f32.mxu0 0.0
    %354 = vmatmul.mubr.f32.gmra.mrb[0].mxu0 %v258
    %v355 = vpop.f32.mrb[0].mxu0
    %v356 = vadd.f32 %v242, %v355
    %v357 = vpop.f32.mrb[0].mxu0
    %358 = vmatprep.mubr.f32.mxu0 0.0
    %359 = vmatmul.mubr.f32.gmra.mrb[0].mxu0 %v261
    %v360 = vpop.f32.mrb[0].mxu0
    %v361 = vadd.f32 %v242, %v360
    %v362 = vpop.f32.mrb[0].mxu0
    %363 = vmatprep.mubr.f32.mxu0 0.0
    %364 = vmatmul.mubr.f32.gmra.mrb[0].mxu0 %v264
    %v365 = vpop.f32.mrb[0].mxu0
    %v366 = vadd.f32 %v242, %v365
    %v367 = vpop.f32.mrb[0].mxu0
    %368 = vmatprep.mubr.f32.mxu0 0.0
    %369 = vmatmul.mubr.f32.gmra.mrb[0].mxu0 %v267
    %v370 = vpop.f32.mrb[0].mxu0
    %v371 = vadd.f32 %v242, %v370
    %v372 = vpop.f32.mrb[0].mxu0
    %373 = vdwg.mxu0
    %v374 = vld [vmem:[%s3] sm:$0xff]
    %v375 = vld [vmem:[%s3 + $0x8] sm:$0xff]
    %v376 = vld [vmem:[%s3 + $0x10] sm:$0xff]
    %v377 = vld [vmem:[%s3 + $0x18] sm:$0xff]
    %v379 = vsel %vm244, 0.0, 0
    %381 = vmatprep.subr.mxu0 0.0
    %382 = vmatpush1.msra.mxu0 %v374
    %383 = vmatprep.subr.mxu0 0.0
    %384 = vmatpush1.msra.mxu0 %v375
    %385 = vmatprep.subr.mxu0 0.0
    %386 = vmatpush1.msra.mxu0 %v376
    %387 = vmatprep.subr.mxu0 0.0
    %388 = vmatpush1.msra.mxu0 %v377
    %389 = vmatprep.subr.mxu0 0.0
    %390 = vmatpush1.msra.mxu0 0.0
    %391 = vmatprep.subr.mxu0 0.0
    %392 = vmatpush1.msra.mxu0 0.0
    %393 = vmatprep.subr.mxu0 0.0
    %394 = vmatpush1.msra.mxu0 0.0
    %395 = vmatprep.subr.mxu0 0.0
    %396 = vmatpush1.msra.mxu0 0.0
    %397 = vmatprep.subr.mxu0 0.0
    %398 = vmatpush1.msra.mxu0 0.0
    %399 = vmatprep.subr.mxu0 0.0
    %400 = vmatpush1.msra.mxu0 0.0
    %401 = vmatprep.subr.mxu0 0.0
    %402 = vmatpush1.msra.mxu0 0.0
    %403 = vmatprep.subr.mxu0 0.0
    %404 = vmatpush1.msra.mxu0 0.0
    %405 = vmatprep.subr.mxu0 0.0
    %406 = vmatpush1.msra.mxu0 0.0
    %407 = vmatprep.subr.mxu0 0.0
    %408 = vmatpush1.msra.mxu0 0.0
    %409 = vmatprep.subr.mxu0 0.0
    %410 = vmatpush1.msra.mxu0 0.0
    %411 = vmatprep.subr.mxu0 0.0
    %412 = vmatpush1.msra.mxu0 0.0
    %413 = vmatprep.subr.mxu0 0.0
    %414 = vmatpush1.msra.mxu0 0.0
    %415 = vmatprep.subr.mxu0 0.0
    %416 = vmatpush1.msra.mxu0 0.0
    %417 = vmatprep.subr.mxu0 0.0
    %418 = vmatpush1.msra.mxu0 0.0
    %419 = vmatprep.subr.mxu0 0.0
    %420 = vmatpush1.msra.mxu0 0.0
    %421 = vmatprep.subr.mxu0 0.0
    %422 = vmatpush1.msra.mxu0 0.0
    %423 = vmatprep.subr.mxu0 0.0
    %424 = vmatpush1.msra.mxu0 0.0
    %425 = vmatprep.subr.mxu0 0.0
    %426 = vmatpush1.msra.mxu0 0.0
    %427 = vmatprep.subr.mxu0 0.0
    %428 = vmatpush1.msra.mxu0 0.0
    %429 = vmatprep.subr.mxu0 0.0
    %430 = vmatpush1.msra.mxu0 0.0
    %431 = vmatprep.subr.mxu0 0.0
    %432 = vmatpush1.msra.mxu0 0.0
    %433 = vmatprep.subr.mxu0 0.0
    %434 = vmatpush1.msra.mxu0 0.0
    %435 = vmatprep.subr.mxu0 0.0
    %436 = vmatpush1.msra.mxu0 0.0
    %437 = vmatprep.subr.mxu0 0.0
    %438 = vmatpush1.msra.mxu0 0.0
    %439 = vmatprep.subr.mxu0 0.0
    %440 = vmatpush1.msra.mxu0 0.0
    %441 = vmatprep.subr.mxu0 0.0
    %442 = vmatpush1.msra.mxu0 0.0
    %443 = vmatprep.subr.mxu0 0.0
    %444 = vmatpush1.msra.mxu0 0.0
    %445 = vmatprep.mubr.f32.mxu0 0.0
    %446 = vmatmul.mubr.f32.gmra.mrb[0].mxu0 %v379
    %v447 = vpop.f32.mrb[0].mxu0
    %v448 = vadd.f32 0.0, %v447
    %v449 = vpop.f32.mrb[0].mxu0
    %450 = vdwg.mxu0
    %v451 = vadd.f32 %v336, %v448
    %v452 = vxor.u32 %v451, 2147483648
    %v453 = vmul.f32 %v452, 1.442695
    %v454 = vpow.pop %v453
    %v455 = vadd.f32 %v454, 1.0
    %v456 = vrcp.pop %v455
    %v457 = vmul.f32 1.0, %v456
    %v458 = vtanh.pop %v451
    %v459 = vmul.f32 %v457, 0.0
    %461 = vrot.lane.b32.xlu0 %v458, 64
    %v462 = vpop.permute.xlu0 %461
    %v464 = vmul.f32 %v457, %v462
    %466 = vrot.lane.b32.xlu0 %v464, 32
    %v467 = vpop.permute.xlu0 %466
    %v469 = vadd.f32 %v459, %v467
    %v470 = vtanh.pop %v469
    %472 = vrot.lane.b32.xlu0 %v470, 64
    %v473 = vpop.permute.xlu0 %472
    %v475 = vmul.f32 %v457, %v473
    %477 = vrot.lane.b32.xlu0 %v475, 32
    %v478 = vpop.permute.xlu0 %477
    %v479 = vsel %vm244, %v478, 0
    %481 = vmatprep.subr.mxu0 0.0
    %482 = vmatpush1.msra.mxu0 %v374
    %483 = vmatprep.subr.mxu0 0.0
    %484 = vmatpush1.msra.mxu0 %v375
    %485 = vmatprep.subr.mxu0 0.0
    %486 = vmatpush1.msra.mxu0 %v376
    %487 = vmatprep.subr.mxu0 0.0
    %488 = vmatpush1.msra.mxu0 %v377
    %489 = vmatprep.subr.mxu0 0.0
    %490 = vmatpush1.msra.mxu0 0.0
    %491 = vmatprep.subr.mxu0 0.0
    %492 = vmatpush1.msra.mxu0 0.0
    %493 = vmatprep.subr.mxu0 0.0
    %494 = vmatpush1.msra.mxu0 0.0
    %495 = vmatprep.subr.mxu0 0.0
    %496 = vmatpush1.msra.mxu0 0.0
    %497 = vmatprep.subr.mxu0 0.0
    %498 = vmatpush1.msra.mxu0 0.0
    %499 = vmatprep.subr.mxu0 0.0
    %500 = vmatpush1.msra.mxu0 0.0
    %501 = vmatprep.subr.mxu0 0.0
    %502 = vmatpush1.msra.mxu0 0.0
    %503 = vmatprep.subr.mxu0 0.0
    %504 = vmatpush1.msra.mxu0 0.0
    %505 = vmatprep.subr.mxu0 0.0
    %506 = vmatpush1.msra.mxu0 0.0
    %507 = vmatprep.subr.mxu0 0.0
    %508 = vmatpush1.msra.mxu0 0.0
    %509 = vmatprep.subr.mxu0 0.0
    %510 = vmatpush1.msra.mxu0 0.0
    %511 = vmatprep.subr.mxu0 0.0
    %512 = vmatpush1.msra.mxu0 0.0
    %513 = vmatprep.subr.mxu0 0.0
    %514 = vmatpush1.msra.mxu0 0.0
    %515 = vmatprep.subr.mxu0 0.0
    %516 = vmatpush1.msra.mxu0 0.0
    %517 = vmatprep.subr.mxu0 0.0
    %518 = vmatpush1.msra.mxu0 0.0
    %519 = vmatprep.subr.mxu0 0.0
    %520 = vmatpush1.msra.mxu0 0.0
    %521 = vmatprep.subr.mxu0 0.0
    %522 = vmatpush1.msra.mxu0 0.0
    %523 = vmatprep.subr.mxu0 0.0
    %524 = vmatpush1.msra.mxu0 0.0
    %525 = vmatprep.subr.mxu0 0.0
    %526 = vmatpush1.msra.mxu0 0.0
    %527 = vmatprep.subr.mxu0 0.0
    %528 = vmatpush1.msra.mxu0 0.0
    %529 = vmatprep.subr.mxu0 0.0
    %530 = vmatpush1.msra.mxu0 0.0
    %531 = vmatprep.subr.mxu0 0.0
    %532 = vmatpush1.msra.mxu0 0.0
    %533 = vmatprep.subr.mxu0 0.0
    %534 = vmatpush1.msra.mxu0 0.0
    %535 = vmatprep.subr.mxu0 0.0
    %536 = vmatpush1.msra.mxu0 0.0
    %537 = vmatprep.subr.mxu0 0.0
    %538 = vmatpush1.msra.mxu0 0.0
    %539 = vmatprep.subr.mxu0 0.0
    %540 = vmatpush1.msra.mxu0 0.0
    %541 = vmatprep.subr.mxu0 0.0
    %542 = vmatpush1.msra.mxu0 0.0
    %543 = vmatprep.subr.mxu0 0.0
    %544 = vmatpush1.msra.mxu0 0.0
    %545 = vmatprep.mubr.f32.mxu0 0.0
    %546 = vmatmul.mubr.f32.gmra.mrb[0].mxu0 %v479
    %v547 = vpop.f32.mrb[0].mxu0
    %v548 = vadd.f32 0.0, %v547
    %v549 = vpop.f32.mrb[0].mxu0
    %550 = vdwg.mxu0
    %v551 = vadd.f32 %v341, %v548
    %v552 = vxor.u32 %v551, 2147483648
    %v553 = vmul.f32 %v552, 1.442695
    %v554 = vpow.pop %v553
    %v555 = vadd.f32 %v554, 1.0
    %v556 = vrcp.pop %v555
    %v557 = vmul.f32 1.0, %v556
    %v558 = vtanh.pop %v551
    %v559 = vmul.f32 %v557, %v469
    %561 = vrot.lane.b32.xlu0 %v558, 64
    %v562 = vpop.permute.xlu0 %561
    %v564 = vmul.f32 %v557, %v562
    %566 = vrot.lane.b32.xlu0 %v564, 32
    %v567 = vpop.permute.xlu0 %566
    %v569 = vadd.f32 %v559, %v567
    %v570 = vtanh.pop %v569
    %572 = vrot.lane.b32.xlu0 %v570, 64
    %v573 = vpop.permute.xlu0 %572
    %v575 = vmul.f32 %v557, %v573
    %577 = vrot.lane.b32.xlu0 %v575, 32
    %v578 = vpop.permute.xlu0 %577
    %v579 = vsel %vm244, %v578, 0
    %581 = vmatprep.subr.mxu0 0.0
    %582 = vmatpush1.msra.mxu0 %v374
    %583 = vmatprep.subr.mxu0 0.0
    %584 = vmatpush1.msra.mxu0 %v375
    %585 = vmatprep.subr.mxu0 0.0
    %586 = vmatpush1.msra.mxu0 %v376
    %587 = vmatprep.subr.mxu0 0.0
    %588 = vmatpush1.msra.mxu0 %v377
    %589 = vmatprep.subr.mxu0 0.0
    %590 = vmatpush1.msra.mxu0 0.0
    %591 = vmatprep.subr.mxu0 0.0
    %592 = vmatpush1.msra.mxu0 0.0
    %593 = vmatprep.subr.mxu0 0.0
    %594 = vmatpush1.msra.mxu0 0.0
    %595 = vmatprep.subr.mxu0 0.0
    %596 = vmatpush1.msra.mxu0 0.0
    %597 = vmatprep.subr.mxu0 0.0
    %598 = vmatpush1.msra.mxu0 0.0
    %599 = vmatprep.subr.mxu0 0.0
    %600 = vmatpush1.msra.mxu0 0.0
    %601 = vmatprep.subr.mxu0 0.0
    %602 = vmatpush1.msra.mxu0 0.0
    %603 = vmatprep.subr.mxu0 0.0
    %604 = vmatpush1.msra.mxu0 0.0
    %605 = vmatprep.subr.mxu0 0.0
    %606 = vmatpush1.msra.mxu0 0.0
    %607 = vmatprep.subr.mxu0 0.0
    %608 = vmatpush1.msra.mxu0 0.0
    %609 = vmatprep.subr.mxu0 0.0
    %610 = vmatpush1.msra.mxu0 0.0
    %611 = vmatprep.subr.mxu0 0.0
    %612 = vmatpush1.msra.mxu0 0.0
    %613 = vmatprep.subr.mxu0 0.0
    %614 = vmatpush1.msra.mxu0 0.0
    %615 = vmatprep.subr.mxu0 0.0
    %616 = vmatpush1.msra.mxu0 0.0
    %617 = vmatprep.subr.mxu0 0.0
    %618 = vmatpush1.msra.mxu0 0.0
    %619 = vmatprep.subr.mxu0 0.0
    %620 = vmatpush1.msra.mxu0 0.0
    %621 = vmatprep.subr.mxu0 0.0
    %622 = vmatpush1.msra.mxu0 0.0
    %623 = vmatprep.subr.mxu0 0.0
    %624 = vmatpush1.msra.mxu0 0.0
    %625 = vmatprep.subr.mxu0 0.0
    %626 = vmatpush1.msra.mxu0 0.0
    %627 = vmatprep.subr.mxu0 0.0
    %628 = vmatpush1.msra.mxu0 0.0
    %629 = vmatprep.subr.mxu0 0.0
    %630 = vmatpush1.msra.mxu0 0.0
    %631 = vmatprep.subr.mxu0 0.0
    %632 = vmatpush1.msra.mxu0 0.0
    %633 = vmatprep.subr.mxu0 0.0
    %634 = vmatpush1.msra.mxu0 0.0
    %635 = vmatprep.subr.mxu0 0.0
    %636 = vmatpush1.msra.mxu0 0.0
    %637 = vmatprep.subr.mxu0 0.0
    %638 = vmatpush1.msra.mxu0 0.0
    %639 = vmatprep.subr.mxu0 0.0
    %640 = vmatpush1.msra.mxu0 0.0
    %641 = vmatprep.subr.mxu0 0.0
    %642 = vmatpush1.msra.mxu0 0.0
    %643 = vmatprep.subr.mxu0 0.0
    %644 = vmatpush1.msra.mxu0 0.0
    %645 = vmatprep.mubr.f32.mxu0 0.0
    %646 = vmatmul.mubr.f32.gmra.mrb[0].mxu0 %v579
    %v647 = vpop.f32.mrb[0].mxu0
    %v648 = vadd.f32 0.0, %v647
    %v649 = vpop.f32.mrb[0].mxu0
    %650 = vdwg.mxu0
    %v651 = vadd.f32 %v346, %v648
    %v652 = vxor.u32 %v651, 2147483648
    %v653 = vmul.f32 %v652, 1.442695
    %v654 = vpow.pop %v653
    %v655 = vadd.f32 %v654, 1.0
    %v656 = vrcp.pop %v655
    %v657 = vmul.f32 1.0, %v656
    %v658 = vtanh.pop %v651
    %v659 = vmul.f32 %v657, %v569
    %661 = vrot.lane.b32.xlu0 %v658, 64
    %v662 = vpop.permute.xlu0 %661
    %v664 = vmul.f32 %v657, %v662
    %666 = vrot.lane.b32.xlu0 %v664, 32
    %v667 = vpop.permute.xlu0 %666
    %v669 = vadd.f32 %v659, %v667
    %v670 = vtanh.pop %v669
    %672 = vrot.lane.b32.xlu0 %v670, 64
    %v673 = vpop.permute.xlu0 %672
    %v675 = vmul.f32 %v657, %v673
    %677 = vrot.lane.b32.xlu0 %v675, 32
    %v678 = vpop.permute.xlu0 %677
    %v679 = vsel %vm244, %v678, 0
    %681 = vmatprep.subr.mxu0 0.0
    %682 = vmatpush1.msra.mxu0 %v374
    %683 = vmatprep.subr.mxu0 0.0
    %684 = vmatpush1.msra.mxu0 %v375
    %685 = vmatprep.subr.mxu0 0.0
    %686 = vmatpush1.msra.mxu0 %v376
    %687 = vmatprep.subr.mxu0 0.0
    %688 = vmatpush1.msra.mxu0 %v377
    %689 = vmatprep.subr.mxu0 0.0
    %690 = vmatpush1.msra.mxu0 0.0
    %691 = vmatprep.subr.mxu0 0.0
    %692 = vmatpush1.msra.mxu0 0.0
    %693 = vmatprep.subr.mxu0 0.0
    %694 = vmatpush1.msra.mxu0 0.0
    %695 = vmatprep.subr.mxu0 0.0
    %696 = vmatpush1.msra.mxu0 0.0
    %697 = vmatprep.subr.mxu0 0.0
    %698 = vmatpush1.msra.mxu0 0.0
    %699 = vmatprep.subr.mxu0 0.0
    %700 = vmatpush1.msra.mxu0 0.0
    %701 = vmatprep.subr.mxu0 0.0
    %702 = vmatpush1.msra.mxu0 0.0
    %703 = vmatprep.subr.mxu0 0.0
    %704 = vmatpush1.msra.mxu0 0.0
    %705 = vmatprep.subr.mxu0 0.0
    %706 = vmatpush1.msra.mxu0 0.0
    %707 = vmatprep.subr.mxu0 0.0
    %708 = vmatpush1.msra.mxu0 0.0
    %709 = vmatprep.subr.mxu0 0.0
    %710 = vmatpush1.msra.mxu0 0.0
    %711 = vmatprep.subr.mxu0 0.0
    %712 = vmatpush1.msra.mxu0 0.0
    %713 = vmatprep.subr.mxu0 0.0
    %714 = vmatpush1.msra.mxu0 0.0
    %715 = vmatprep.subr.mxu0 0.0
    %716 = vmatpush1.msra.mxu0 0.0
    %717 = vmatprep.subr.mxu0 0.0
    %718 = vmatpush1.msra.mxu0 0.0
    %719 = vmatprep.subr.mxu0 0.0
    %720 = vmatpush1.msra.mxu0 0.0
    %721 = vmatprep.subr.mxu0 0.0
    %722 = vmatpush1.msra.mxu0 0.0
    %723 = vmatprep.subr.mxu0 0.0
    %724 = vmatpush1.msra.mxu0 0.0
    %725 = vmatprep.subr.mxu0 0.0
    %726 = vmatpush1.msra.mxu0 0.0
    %727 = vmatprep.subr.mxu0 0.0
    %728 = vmatpush1.msra.mxu0 0.0
    %729 = vmatprep.subr.mxu0 0.0
    %730 = vmatpush1.msra.mxu0 0.0
    %731 = vmatprep.subr.mxu0 0.0
    %732 = vmatpush1.msra.mxu0 0.0
    %733 = vmatprep.subr.mxu0 0.0
    %734 = vmatpush1.msra.mxu0 0.0
    %735 = vmatprep.subr.mxu0 0.0
    %736 = vmatpush1.msra.mxu0 0.0
    %737 = vmatprep.subr.mxu0 0.0
    %738 = vmatpush1.msra.mxu0 0.0
    %739 = vmatprep.subr.mxu0 0.0
    %740 = vmatpush1.msra.mxu0 0.0
    %741 = vmatprep.subr.mxu0 0.0
    %742 = vmatpush1.msra.mxu0 0.0
    %743 = vmatprep.subr.mxu0 0.0
    %744 = vmatpush1.msra.mxu0 0.0
    %745 = vmatprep.mubr.f32.mxu0 0.0
    %746 = vmatmul.mubr.f32.gmra.mrb[0].mxu0 %v679
    %v747 = vpop.f32.mrb[0].mxu0
    %v748 = vadd.f32 0.0, %v747
    %v749 = vpop.f32.mrb[0].mxu0
    %750 = vdwg.mxu0
    %v751 = vadd.f32 %v351, %v748
    %v752 = vxor.u32 %v751, 2147483648
    %v753 = vmul.f32 %v752, 1.442695
    %v754 = vpow.pop %v753
    %v755 = vadd.f32 %v754, 1.0
    %v756 = vrcp.pop %v755
    %v757 = vmul.f32 1.0, %v756
    %v758 = vtanh.pop %v751
    %v759 = vmul.f32 %v757, %v669
    %761 = vrot.lane.b32.xlu0 %v758, 64
    %v762 = vpop.permute.xlu0 %761
    %v764 = vmul.f32 %v757, %v762
    %766 = vrot.lane.b32.xlu0 %v764, 32
    %v767 = vpop.permute.xlu0 %766
    %v769 = vadd.f32 %v759, %v767
    %v770 = vtanh.pop %v769
    %772 = vrot.lane.b32.xlu0 %v770, 64
    %v773 = vpop.permute.xlu0 %772
    %v775 = vmul.f32 %v757, %v773
    %777 = vrot.lane.b32.xlu0 %v775, 32
    %v778 = vpop.permute.xlu0 %777
    %v779 = vsel %vm244, %v778, 0
    %781 = vmatprep.subr.mxu0 0.0
    %782 = vmatpush1.msra.mxu0 %v374
    %783 = vmatprep.subr.mxu0 0.0
    %784 = vmatpush1.msra.mxu0 %v375
    %785 = vmatprep.subr.mxu0 0.0
    %786 = vmatpush1.msra.mxu0 %v376
    %787 = vmatprep.subr.mxu0 0.0
    %788 = vmatpush1.msra.mxu0 %v377
    %789 = vmatprep.subr.mxu0 0.0
    %790 = vmatpush1.msra.mxu0 0.0
    %791 = vmatprep.subr.mxu0 0.0
    %792 = vmatpush1.msra.mxu0 0.0
    %793 = vmatprep.subr.mxu0 0.0
    %794 = vmatpush1.msra.mxu0 0.0
    %795 = vmatprep.subr.mxu0 0.0
    %796 = vmatpush1.msra.mxu0 0.0
    %797 = vmatprep.subr.mxu0 0.0
    %798 = vmatpush1.msra.mxu0 0.0
    %799 = vmatprep.subr.mxu0 0.0
    %800 = vmatpush1.msra.mxu0 0.0
    %801 = vmatprep.subr.mxu0 0.0
    %802 = vmatpush1.msra.mxu0 0.0
    %803 = vmatprep.subr.mxu0 0.0
    %804 = vmatpush1.msra.mxu0 0.0
    %805 = vmatprep.subr.mxu0 0.0
    %806 = vmatpush1.msra.mxu0 0.0
    %807 = vmatprep.subr.mxu0 0.0
    %808 = vmatpush1.msra.mxu0 0.0
    %809 = vmatprep.subr.mxu0 0.0
    %810 = vmatpush1.msra.mxu0 0.0
    %811 = vmatprep.subr.mxu0 0.0
    %812 = vmatpush1.msra.mxu0 0.0
    %813 = vmatprep.subr.mxu0 0.0
    %814 = vmatpush1.msra.mxu0 0.0
    %815 = vmatprep.subr.mxu0 0.0
    %816 = vmatpush1.msra.mxu0 0.0
    %817 = vmatprep.subr.mxu0 0.0
    %818 = vmatpush1.msra.mxu0 0.0
    %819 = vmatprep.subr.mxu0 0.0
    %820 = vmatpush1.msra.mxu0 0.0
    %821 = vmatprep.subr.mxu0 0.0
    %822 = vmatpush1.msra.mxu0 0.0
    %823 = vmatprep.subr.mxu0 0.0
    %824 = vmatpush1.msra.mxu0 0.0
    %825 = vmatprep.subr.mxu0 0.0
    %826 = vmatpush1.msra.mxu0 0.0
    %827 = vmatprep.subr.mxu0 0.0
    %828 = vmatpush1.msra.mxu0 0.0
    %829 = vmatprep.subr.mxu0 0.0
    %830 = vmatpush1.msra.mxu0 0.0
    %831 = vmatprep.subr.mxu0 0.0
    %832 = vmatpush1.msra.mxu0 0.0
    %833 = vmatprep.subr.mxu0 0.0
    %834 = vmatpush1.msra.mxu0 0.0
    %835 = vmatprep.subr.mxu0 0.0
    %836 = vmatpush1.msra.mxu0 0.0
    %837 = vmatprep.subr.mxu0 0.0
    %838 = vmatpush1.msra.mxu0 0.0
    %839 = vmatprep.subr.mxu0 0.0
    %840 = vmatpush1.msra.mxu0 0.0
    %841 = vmatprep.subr.mxu0 0.0
    %842 = vmatpush1.msra.mxu0 0.0
    %843 = vmatprep.subr.mxu0 0.0
    %844 = vmatpush1.msra.mxu0 0.0
    %845 = vmatprep.mubr.f32.mxu0 0.0
    %846 = vmatmul.mubr.f32.gmra.mrb[0].mxu0 %v779
    %v847 = vpop.f32.mrb[0].mxu0
    %v848 = vadd.f32 0.0, %v847
    %v849 = vpop.f32.mrb[0].mxu0
    %850 = vdwg.mxu0
    %v851 = vadd.f32 %v356, %v848
    %v852 = vxor.u32 %v851, 2147483648
    %v853 = vmul.f32 %v852, 1.442695
    %v854 = vpow.pop %v853
    %v855 = vadd.f32 %v854, 1.0
    %v856 = vrcp.pop %v855
    %v857 = vmul.f32 1.0, %v856
    %v858 = vtanh.pop %v851
    %v859 = vmul.f32 %v857, %v769
    %861 = vrot.lane.b32.xlu0 %v858, 64
    %v862 = vpop.permute.xlu0 %861
    %v864 = vmul.f32 %v857, %v862
    %866 = vrot.lane.b32.xlu0 %v864, 32
    %v867 = vpop.permute.xlu0 %866
    %v869 = vadd.f32 %v859, %v867
    %v870 = vtanh.pop %v869
    %872 = vrot.lane.b32.xlu0 %v870, 64
    %v873 = vpop.permute.xlu0 %872
    %v875 = vmul.f32 %v857, %v873
    %877 = vrot.lane.b32.xlu0 %v875, 32
    %v878 = vpop.permute.xlu0 %877
    %v879 = vsel %vm244, %v878, 0
    %881 = vmatprep.subr.mxu0 0.0
    %882 = vmatpush1.msra.mxu0 %v374
    %883 = vmatprep.subr.mxu0 0.0
    %884 = vmatpush1.msra.mxu0 %v375
    %885 = vmatprep.subr.mxu0 0.0
    %886 = vmatpush1.msra.mxu0 %v376
    %887 = vmatprep.subr.mxu0 0.0
    %888 = vmatpush1.msra.mxu0 %v377
    %889 = vmatprep.subr.mxu0 0.0
    %890 = vmatpush1.msra.mxu0 0.0
    %891 = vmatprep.subr.mxu0 0.0
    %892 = vmatpush1.msra.mxu0 0.0
    %893 = vmatprep.subr.mxu0 0.0
    %894 = vmatpush1.msra.mxu0 0.0
    %895 = vmatprep.subr.mxu0 0.0
    %896 = vmatpush1.msra.mxu0 0.0
    %897 = vmatprep.subr.mxu0 0.0
    %898 = vmatpush1.msra.mxu0 0.0
    %899 = vmatprep.subr.mxu0 0.0
    %900 = vmatpush1.msra.mxu0 0.0
    %901 = vmatprep.subr.mxu0 0.0
    %902 = vmatpush1.msra.mxu0 0.0
    %903 = vmatprep.subr.mxu0 0.0
    %904 = vmatpush1.msra.mxu0 0.0
    %905 = vmatprep.subr.mxu0 0.0
    %906 = vmatpush1.msra.mxu0 0.0
    %907 = vmatprep.subr.mxu0 0.0
    %908 = vmatpush1.msra.mxu0 0.0
    %909 = vmatprep.subr.mxu0 0.0
    %910 = vmatpush1.msra.mxu0 0.0
    %911 = vmatprep.subr.mxu0 0.0
    %912 = vmatpush1.msra.mxu0 0.0
    %913 = vmatprep.subr.mxu0 0.0
    %914 = vmatpush1.msra.mxu0 0.0
    %915 = vmatprep.subr.mxu0 0.0
    %916 = vmatpush1.msra.mxu0 0.0
    %917 = vmatprep.subr.mxu0 0.0
    %918 = vmatpush1.msra.mxu0 0.0
    %919 = vmatprep.subr.mxu0 0.0
    %920 = vmatpush1.msra.mxu0 0.0
    %921 = vmatprep.subr.mxu0 0.0
    %922 = vmatpush1.msra.mxu0 0.0
    %923 = vmatprep.subr.mxu0 0.0
    %924 = vmatpush1.msra.mxu0 0.0
    %925 = vmatprep.subr.mxu0 0.0
    %926 = vmatpush1.msra.mxu0 0.0
    %927 = vmatprep.subr.mxu0 0.0
    %928 = vmatpush1.msra.mxu0 0.0
    %929 = vmatprep.subr.mxu0 0.0
    %930 = vmatpush1.msra.mxu0 0.0
    %931 = vmatprep.subr.mxu0 0.0
    %932 = vmatpush1.msra.mxu0 0.0
    %933 = vmatprep.subr.mxu0 0.0
    %934 = vmatpush1.msra.mxu0 0.0
    %935 = vmatprep.subr.mxu0 0.0
    %936 = vmatpush1.msra.mxu0 0.0
    %937 = vmatprep.subr.mxu0 0.0
    %938 = vmatpush1.msra.mxu0 0.0
    %939 = vmatprep.subr.mxu0 0.0
    %940 = vmatpush1.msra.mxu0 0.0
    %941 = vmatprep.subr.mxu0 0.0
    %942 = vmatpush1.msra.mxu0 0.0
    %943 = vmatprep.subr.mxu0 0.0
    %944 = vmatpush1.msra.mxu0 0.0
    %945 = vmatprep.mubr.f32.mxu0 0.0
    %946 = vmatmul.mubr.f32.gmra.mrb[0].mxu0 %v879
    %v947 = vpop.f32.mrb[0].mxu0
    %v948 = vadd.f32 0.0, %v947
    %v949 = vpop.f32.mrb[0].mxu0
    %950 = vdwg.mxu0
    %v951 = vadd.f32 %v361, %v948
    %v952 = vxor.u32 %v951, 2147483648
    %v953 = vmul.f32 %v952, 1.442695
    %v954 = vpow.pop %v953
    %v955 = vadd.f32 %v954, 1.0
    %v956 = vrcp.pop %v955
    %v957 = vmul.f32 1.0, %v956
    %v958 = vtanh.pop %v951
    %v959 = vmul.f32 %v957, %v869
    %961 = vrot.lane.b32.xlu0 %v958, 64
    %v962 = vpop.permute.xlu0 %961
    %v964 = vmul.f32 %v957, %v962
    %966 = vrot.lane.b32.xlu0 %v964, 32
    %v967 = vpop.permute.xlu0 %966
    %v969 = vadd.f32 %v959, %v967
    %v970 = vtanh.pop %v969
    %972 = vrot.lane.b32.xlu0 %v970, 64
    %v973 = vpop.permute.xlu0 %972
    %v975 = vmul.f32 %v957, %v973
    %977 = vrot.lane.b32.xlu0 %v975, 32
    %v978 = vpop.permute.xlu0 %977
    %v979 = vsel %vm244, %v978, 0
    %981 = vmatprep.subr.mxu0 0.0
    %982 = vmatpush1.msra.mxu0 %v374
    %983 = vmatprep.subr.mxu0 0.0
    %984 = vmatpush1.msra.mxu0 %v375
    %985 = vmatprep.subr.mxu0 0.0
    %986 = vmatpush1.msra.mxu0 %v376
    %987 = vmatprep.subr.mxu0 0.0
    %988 = vmatpush1.msra.mxu0 %v377
    %989 = vmatprep.subr.mxu0 0.0
    %990 = vmatpush1.msra.mxu0 0.0
    %991 = vmatprep.subr.mxu0 0.0
    %992 = vmatpush1.msra.mxu0 0.0
    %993 = vmatprep.subr.mxu0 0.0
    %994 = vmatpush1.msra.mxu0 0.0
    %995 = vmatprep.subr.mxu0 0.0
    %996 = vmatpush1.msra.mxu0 0.0
    %997 = vmatprep.subr.mxu0 0.0
    %998 = vmatpush1.msra.mxu0 0.0
    %999 = vmatprep.subr.mxu0 0.0
    %1000 = vmatpush1.msra.mxu0 0.0
    %1001 = vmatprep.subr.mxu0 0.0
    %1002 = vmatpush1.msra.mxu0 0.0
    %1003 = vmatprep.subr.mxu0 0.0
    %1004 = vmatpush1.msra.mxu0 0.0
    %1005 = vmatprep.subr.mxu0 0.0
    %1006 = vmatpush1.msra.mxu0 0.0
    %1007 = vmatprep.subr.mxu0 0.0
    %1008 = vmatpush1.msra.mxu0 0.0
    %1009 = vmatprep.subr.mxu0 0.0
    %1010 = vmatpush1.msra.mxu0 0.0
    %1011 = vmatprep.subr.mxu0 0.0
    %1012 = vmatpush1.msra.mxu0 0.0
    %1013 = vmatprep.subr.mxu0 0.0
    %1014 = vmatpush1.msra.mxu0 0.0
    %1015 = vmatprep.subr.mxu0 0.0
    %1016 = vmatpush1.msra.mxu0 0.0
    %1017 = vmatprep.subr.mxu0 0.0
    %1018 = vmatpush1.msra.mxu0 0.0
    %1019 = vmatprep.subr.mxu0 0.0
    %1020 = vmatpush1.msra.mxu0 0.0
    %1021 = vmatprep.subr.mxu0 0.0
    %1022 = vmatpush1.msra.mxu0 0.0
    %1023 = vmatprep.subr.mxu0 0.0
    %1024 = vmatpush1.msra.mxu0 0.0
    %1025 = vmatprep.subr.mxu0 0.0
    %1026 = vmatpush1.msra.mxu0 0.0
    %1027 = vmatprep.subr.mxu0 0.0
    %1028 = vmatpush1.msra.mxu0 0.0
    %1029 = vmatprep.subr.mxu0 0.0
    %1030 = vmatpush1.msra.mxu0 0.0
    %1031 = vmatprep.subr.mxu0 0.0
    %1032 = vmatpush1.msra.mxu0 0.0
    %1033 = vmatprep.subr.mxu0 0.0
    %1034 = vmatpush1.msra.mxu0 0.0
    %1035 = vmatprep.subr.mxu0 0.0
    %1036 = vmatpush1.msra.mxu0 0.0
    %1037 = vmatprep.subr.mxu0 0.0
    %1038 = vmatpush1.msra.mxu0 0.0
    %1039 = vmatprep.subr.mxu0 0.0
    %1040 = vmatpush1.msra.mxu0 0.0
    %1041 = vmatprep.subr.mxu0 0.0
    %1042 = vmatpush1.msra.mxu0 0.0
    %1043 = vmatprep.subr.mxu0 0.0
    %1044 = vmatpush1.msra.mxu0 0.0
    %1045 = vmatprep.mubr.f32.mxu0 0.0
    %1046 = vmatmul.mubr.f32.gmra.mrb[0].mxu0 %v979
    %v1047 = vpop.f32.mrb[0].mxu0
    %v1048 = vadd.f32 0.0, %v1047
    %v1049 = vpop.f32.mrb[0].mxu0
    %1050 = vdwg.mxu0
    %v1051 = vadd.f32 %v366, %v1048
    %v1052 = vxor.u32 %v1051, 2147483648
    %v1053 = vmul.f32 %v1052, 1.442695
    %v1054 = vpow.pop %v1053
    %v1055 = vadd.f32 %v1054, 1.0
    %v1056 = vrcp.pop %v1055
    %v1057 = vmul.f32 1.0, %v1056
    %v1058 = vtanh.pop %v1051
    %v1059 = vmul.f32 %v1057, %v969
    %1061 = vrot.lane.b32.xlu0 %v1058, 64
    %v1062 = vpop.permute.xlu0 %1061
    %v1064 = vmul.f32 %v1057, %v1062
    %1066 = vrot.lane.b32.xlu0 %v1064, 32
    %v1067 = vpop.permute.xlu0 %1066
    %v1069 = vadd.f32 %v1059, %v1067
    %v1070 = vtanh.pop %v1069
    %1072 = vrot.lane.b32.xlu0 %v1070, 64
    %v1073 = vpop.permute.xlu0 %1072
    %v1075 = vmul.f32 %v1057, %v1073
    %1077 = vrot.lane.b32.xlu0 %v1075, 32
    %v1078 = vpop.permute.xlu0 %1077
    %v1079 = vsel %vm244, %v1078, 0
    %1081 = vmatprep.subr.mxu0 0.0
    %1082 = vmatpush1.msra.mxu0 %v374
    %1083 = vmatprep.subr.mxu0 0.0
    %1084 = vmatpush1.msra.mxu0 %v375
    %1085 = vmatprep.subr.mxu0 0.0
    %1086 = vmatpush1.msra.mxu0 %v376
    %1087 = vmatprep.subr.mxu0 0.0
    %1088 = vmatpush1.msra.mxu0 %v377
    %1089 = vmatprep.subr.mxu0 0.0
    %1090 = vmatpush1.msra.mxu0 0.0
    %1091 = vmatprep.subr.mxu0 0.0
    %1092 = vmatpush1.msra.mxu0 0.0
    %1093 = vmatprep.subr.mxu0 0.0
    %1094 = vmatpush1.msra.mxu0 0.0
    %1095 = vmatprep.subr.mxu0 0.0
    %1096 = vmatpush1.msra.mxu0 0.0
    %1097 = vmatprep.subr.mxu0 0.0
    %1098 = vmatpush1.msra.mxu0 0.0
    %1099 = vmatprep.subr.mxu0 0.0
    %1100 = vmatpush1.msra.mxu0 0.0
    %1101 = vmatprep.subr.mxu0 0.0
    %1102 = vmatpush1.msra.mxu0 0.0
    %1103 = vmatprep.subr.mxu0 0.0
    %1104 = vmatpush1.msra.mxu0 0.0
    %1105 = vmatprep.subr.mxu0 0.0
    %1106 = vmatpush1.msra.mxu0 0.0
    %1107 = vmatprep.subr.mxu0 0.0
    %1108 = vmatpush1.msra.mxu0 0.0
    %1109 = vmatprep.subr.mxu0 0.0
    %1110 = vmatpush1.msra.mxu0 0.0
    %1111 = vmatprep.subr.mxu0 0.0
    %1112 = vmatpush1.msra.mxu0 0.0
    %1113 = vmatprep.subr.mxu0 0.0
    %1114 = vmatpush1.msra.mxu0 0.0
    %1115 = vmatprep.subr.mxu0 0.0
    %1116 = vmatpush1.msra.mxu0 0.0
    %1117 = vmatprep.subr.mxu0 0.0
    %1118 = vmatpush1.msra.mxu0 0.0
    %1119 = vmatprep.subr.mxu0 0.0
    %1120 = vmatpush1.msra.mxu0 0.0
    %1121 = vmatprep.subr.mxu0 0.0
    %1122 = vmatpush1.msra.mxu0 0.0
    %1123 = vmatprep.subr.mxu0 0.0
    %1124 = vmatpush1.msra.mxu0 0.0
    %1125 = vmatprep.subr.mxu0 0.0
    %1126 = vmatpush1.msra.mxu0 0.0
    %1127 = vmatprep.subr.mxu0 0.0
    %1128 = vmatpush1.msra.mxu0 0.0
    %1129 = vmatprep.subr.mxu0 0.0
    %1130 = vmatpush1.msra.mxu0 0.0
    %1131 = vmatprep.subr.mxu0 0.0
    %1132 = vmatpush1.msra.mxu0 0.0
    %1133 = vmatprep.subr.mxu0 0.0
    %1134 = vmatpush1.msra.mxu0 0.0
    %1135 = vmatprep.subr.mxu0 0.0
    %1136 = vmatpush1.msra.mxu0 0.0
    %1137 = vmatprep.subr.mxu0 0.0
    %1138 = vmatpush1.msra.mxu0 0.0
    %1139 = vmatprep.subr.mxu0 0.0
    %1140 = vmatpush1.msra.mxu0 0.0
    %1141 = vmatprep.subr.mxu0 0.0
    %1142 = vmatpush1.msra.mxu0 0.0
    %1143 = vmatprep.subr.mxu0 0.0
    %1144 = vmatpush1.msra.mxu0 0.0
    %1145 = vmatprep.mubr.f32.mxu0 0.0
    %1146 = vmatmul.mubr.f32.gmra.mrb[0].mxu0 %v1079
    %v1147 = vpop.f32.mrb[0].mxu0
    %v1148 = vadd.f32 0.0, %v1147
    %v1149 = vpop.f32.mrb[0].mxu0
    %1150 = vdwg.mxu0
    %v1151 = vadd.f32 %v371, %v1148
    %v1152 = vxor.u32 %v1151, 2147483648
    %v1153 = vmul.f32 %v1152, 1.442695
    %v1154 = vpow.pop %v1153
    %v1155 = vadd.f32 %v1154, 1.0
    %v1156 = vrcp.pop %v1155
    %v1157 = vmul.f32 1.0, %v1156
    %v1158 = vtanh.pop %v1151
    %v1159 = vmul.f32 %v1157, %v1069
    %1161 = vrot.lane.b32.xlu0 %v1158, 64
    %v1162 = vpop.permute.xlu0 %1161
    %v1164 = vmul.f32 %v1157, %v1162
    %1166 = vrot.lane.b32.xlu0 %v1164, 32
    %v1167 = vpop.permute.xlu0 %1166
    %v1169 = vadd.f32 %v1159, %v1167
    %v1170 = vtanh.pop %v1169
    %1172 = vrot.lane.b32.xlu0 %v1170, 64
    %v1173 = vpop.permute.xlu0 %1172
    %v1175 = vmul.f32 %v1157, %v1173
    %s1176 = scalar_lea.vmem [#allocation4], 32
    %v1177 = vld [vmem:[%s1176] sm:$0xff]
    %v1178 = vld [vmem:[%s1176 + $0x8] sm:$0xff]
    %v1179 = vld [vmem:[%s1176 + $0x10] sm:$0xff]
    %v1180 = vld [vmem:[%s1176 + $0x18] sm:$0xff]
    %s1181 = scalar_lea.vmem %s4, 1
    %v1182 = vld [vmem:[%s1181] sm:$0x1]
    %v1184 = vlaneseq
    %v1185 = vshrl.u32 %v1184, 7
    %v1186 = vsub.s32 0, %v1185
    %v1187 = vrot.slane %v1182, %v1186
    %1190 = vrot.lane.b32.xlu0 %v1175, 32
    %v1191 = vpop.permute.xlu0 %1190
    %v1192 = vsel %vm244, %v1191, 0
    %1194 = vmatprep.subr.mxu0 0.0
    %1195 = vmatpush1.msra.mxu0 %v1177
    %1196 = vmatprep.subr.mxu0 0.0
    %1197 = vmatpush1.msra.mxu0 %v1178
    %1198 = vmatprep.subr.mxu0 0.0
    %1199 = vmatpush1.msra.mxu0 %v1179
    %1200 = vmatprep.subr.mxu0 0.0
    %1201 = vmatpush1.msra.mxu0 %v1180
    %1202 = vmatprep.subr.mxu0 0.0
    %1203 = vmatpush1.msra.mxu0 0.0
    %1204 = vmatprep.subr.mxu0 0.0
    %1205 = vmatpush1.msra.mxu0 0.0
    %1206 = vmatprep.subr.mxu0 0.0
    %1207 = vmatpush1.msra.mxu0 0.0
    %1208 = vmatprep.subr.mxu0 0.0
    %1209 = vmatpush1.msra.mxu0 0.0
    %1210 = vmatprep.subr.mxu0 0.0
    %1211 = vmatpush1.msra.mxu0 0.0
    %1212 = vmatprep.subr.mxu0 0.0
    %1213 = vmatpush1.msra.mxu0 0.0
    %1214 = vmatprep.subr.mxu0 0.0
    %1215 = vmatpush1.msra.mxu0 0.0
    %1216 = vmatprep.subr.mxu0 0.0
    %1217 = vmatpush1.msra.mxu0 0.0
    %1218 = vmatprep.subr.mxu0 0.0
    %1219 = vmatpush1.msra.mxu0 0.0
    %1220 = vmatprep.subr.mxu0 0.0
    %1221 = vmatpush1.msra.mxu0 0.0
    %1222 = vmatprep.subr.mxu0 0.0
    %1223 = vmatpush1.msra.mxu0 0.0
    %1224 = vmatprep.subr.mxu0 0.0
    %1225 = vmatpush1.msra.mxu0 0.0
    %1226 = vmatprep.subr.mxu0 0.0
    %1227 = vmatpush1.msra.mxu0 0.0
    %1228 = vmatprep.subr.mxu0 0.0
    %1229 = vmatpush1.msra.mxu0 0.0
    %1230 = vmatprep.subr.mxu0 0.0
    %1231 = vmatpush1.msra.mxu0 0.0
    %1232 = vmatprep.subr.mxu0 0.0
    %1233 = vmatpush1.msra.mxu0 0.0
    %1234 = vmatprep.subr.mxu0 0.0
    %1235 = vmatpush1.msra.mxu0 0.0
    %1236 = vmatprep.subr.mxu0 0.0
    %1237 = vmatpush1.msra.mxu0 0.0
    %1238 = vmatprep.subr.mxu0 0.0
    %1239 = vmatpush1.msra.mxu0 0.0
    %1240 = vmatprep.subr.mxu0 0.0
    %1241 = vmatpush1.msra.mxu0 0.0
    %1242 = vmatprep.subr.mxu0 0.0
    %1243 = vmatpush1.msra.mxu0 0.0
    %1244 = vmatprep.subr.mxu0 0.0
    %1245 = vmatpush1.msra.mxu0 0.0
    %1246 = vmatprep.subr.mxu0 0.0
    %1247 = vmatpush1.msra.mxu0 0.0
    %1248 = vmatprep.subr.mxu0 0.0
    %1249 = vmatpush1.msra.mxu0 0.0
    %1250 = vmatprep.subr.mxu0 0.0
    %1251 = vmatpush1.msra.mxu0 0.0
    %1252 = vmatprep.subr.mxu0 0.0
    %1253 = vmatpush1.msra.mxu0 0.0
    %1254 = vmatprep.subr.mxu0 0.0
    %1255 = vmatpush1.msra.mxu0 0.0
    %1256 = vmatprep.subr.mxu0 0.0
    %1257 = vmatpush1.msra.mxu0 0.0
    %1258 = vmatprep.mubr.f32.mxu0 0.0
    %1259 = vmatmul.mubr.f32.gmra.mrb[0].mxu0 %v479
    %v1260 = vpop.f32.mrb[0].mxu0
    %v1261 = vadd.f32 %v1187, %v1260
    %v1262 = vpop.f32.mrb[0].mxu0
    %1263 = vmatprep.mubr.f32.mxu0 0.0
    %1264 = vmatmul.mubr.f32.gmra.mrb[0].mxu0 %v579
    %v1265 = vpop.f32.mrb[0].mxu0
    %v1266 = vadd.f32 %v1187, %v1265
    %v1267 = vpop.f32.mrb[0].mxu0
    %1268 = vmatprep.mubr.f32.mxu0 0.0
    %1269 = vmatmul.mubr.f32.gmra.mrb[0].mxu0 %v679
    %v1270 = vpop.f32.mrb[0].mxu0
    %v1271 = vadd.f32 %v1187, %v1270
    %v1272 = vpop.f32.mrb[0].mxu0
    %1273 = vmatprep.mubr.f32.mxu0 0.0
    %1274 = vmatmul.mubr.f32.gmra.mrb[0].mxu0 %v779
    %v1275 = vpop.f32.mrb[0].mxu0
    %v1276 = vadd.f32 %v1187, %v1275
    %v1277 = vpop.f32.mrb[0].mxu0
    %1278 = vmatprep.mubr.f32.mxu0 0.0
    %1279 = vmatmul.mubr.f32.gmra.mrb[0].mxu0 %v879
    %v1280 = vpop.f32.mrb[0].mxu0
    %v1281 = vadd.f32 %v1187, %v1280
    %v1282 = vpop.f32.mrb[0].mxu0
    %1283 = vmatprep.mubr.f32.mxu0 0.0
    %1284 = vmatmul.mubr.f32.gmra.mrb[0].mxu0 %v979
    %v1285 = vpop.f32.mrb[0].mxu0
    %v1286 = vadd.f32 %v1187, %v1285
    %v1287 = vpop.f32.mrb[0].mxu0
    %1288 = vmatprep.mubr.f32.mxu0 0.0
    %1289 = vmatmul.mubr.f32.gmra.mrb[0].mxu0 %v1079
    %v1290 = vpop.f32.mrb[0].mxu0
    %v1291 = vadd.f32 %v1187, %v1290
    %v1292 = vpop.f32.mrb[0].mxu0
    %1293 = vmatprep.mubr.f32.mxu0 0.0
    %1294 = vmatmul.mubr.f32.gmra.mrb[0].mxu0 %v1192
    %v1295 = vpop.f32.mrb[0].mxu0
    %v1296 = vadd.f32 %v1187, %v1295
    %v1297 = vpop.f32.mrb[0].mxu0
    %1298 = vdwg.mxu0
    %s1299 = scalar_lea.vmem %s3, 32
    %v1300 = vld [vmem:[%s1299] sm:$0xff]
    %v1301 = vld [vmem:[%s1299 + $0x8] sm:$0xff]
    %v1302 = vld [vmem:[%s1299 + $0x10] sm:$0xff]
    %v1303 = vld [vmem:[%s1299 + $0x18] sm:$0xff]
    %1304 = vmatprep.subr.mxu0 0.0
    %1305 = vmatpush1.msra.mxu0 %v1300
    %1306 = vmatprep.subr.mxu0 0.0
    %1307 = vmatpush1.msra.mxu0 %v1301
    %1308 = vmatprep.subr.mxu0 0.0
    %1309 = vmatpush1.msra.mxu0 %v1302
    %1310 = vmatprep.subr.mxu0 0.0
    %1311 = vmatpush1.msra.mxu0 %v1303
    %1312 = vmatprep.subr.mxu0 0.0
    %1313 = vmatpush1.msra.mxu0 0.0
    %1314 = vmatprep.subr.mxu0 0.0
    %1315 = vmatpush1.msra.mxu0 0.0
    %1316 = vmatprep.subr.mxu0 0.0
    %1317 = vmatpush1.msra.mxu0 0.0
    %1318 = vmatprep.subr.mxu0 0.0
    %1319 = vmatpush1.msra.mxu0 0.0
    %1320 = vmatprep.subr.mxu0 0.0
    %1321 = vmatpush1.msra.mxu0 0.0
    %1322 = vmatprep.subr.mxu0 0.0
    %1323 = vmatpush1.msra.mxu0 0.0
    %1324 = vmatprep.subr.mxu0 0.0
    %1325 = vmatpush1.msra.mxu0 0.0
    %1326 = vmatprep.subr.mxu0 0.0
    %1327 = vmatpush1.msra.mxu0 0.0
    %1328 = vmatprep.subr.mxu0 0.0
    %1329 = vmatpush1.msra.mxu0 0.0
    %1330 = vmatprep.subr.mxu0 0.0
    %1331 = vmatpush1.msra.mxu0 0.0
    %1332 = vmatprep.subr.mxu0 0.0
    %1333 = vmatpush1.msra.mxu0 0.0
    %1334 = vmatprep.subr.mxu0 0.0
    %1335 = vmatpush1.msra.mxu0 0.0
    %1336 = vmatprep.subr.mxu0 0.0
    %1337 = vmatpush1.msra.mxu0 0.0
    %1338 = vmatprep.subr.mxu0 0.0
    %1339 = vmatpush1.msra.mxu0 0.0
    %1340 = vmatprep.subr.mxu0 0.0
    %1341 = vmatpush1.msra.mxu0 0.0
    %1342 = vmatprep.subr.mxu0 0.0
    %1343 = vmatpush1.msra.mxu0 0.0
    %1344 = vmatprep.subr.mxu0 0.0
    %1345 = vmatpush1.msra.mxu0 0.0
    %1346 = vmatprep.subr.mxu0 0.0
    %1347 = vmatpush1.msra.mxu0 0.0
    %1348 = vmatprep.subr.mxu0 0.0
    %1349 = vmatpush1.msra.mxu0 0.0
    %1350 = vmatprep.subr.mxu0 0.0
    %1351 = vmatpush1.msra.mxu0 0.0
    %1352 = vmatprep.subr.mxu0 0.0
    %1353 = vmatpush1.msra.mxu0 0.0
    %1354 = vmatprep.subr.mxu0 0.0
    %1355 = vmatpush1.msra.mxu0 0.0
    %1356 = vmatprep.subr.mxu0 0.0
    %1357 = vmatpush1.msra.mxu0 0.0
    %1358 = vmatprep.subr.mxu0 0.0
    %1359 = vmatpush1.msra.mxu0 0.0
    %1360 = vmatprep.subr.mxu0 0.0
    %1361 = vmatpush1.msra.mxu0 0.0
    %1362 = vmatprep.subr.mxu0 0.0
    %1363 = vmatpush1.msra.mxu0 0.0
    %1364 = vmatprep.subr.mxu0 0.0
    %1365 = vmatpush1.msra.mxu0 0.0
    %1366 = vmatprep.subr.mxu0 0.0
    %1367 = vmatpush1.msra.mxu0 0.0
    %1368 = vmatprep.mubr.f32.mxu0 0.0
    %1369 = vmatmul.mubr.f32.gmra.mrb[0].mxu0 %v379
    %v1370 = vpop.f32.mrb[0].mxu0
    %v1371 = vadd.f32 0.0, %v1370
    %v1372 = vpop.f32.mrb[0].mxu0
    %1373 = vdwg.mxu0
    %v1374 = vadd.f32 %v1261, %v1371
    %v1375 = vxor.u32 %v1374, 2147483648
    %v1376 = vmul.f32 %v1375, 1.442695
    %v1377 = vpow.pop %v1376
    %v1378 = vadd.f32 %v1377, 1.0
    %v1379 = vrcp.pop %v1378
    %v1380 = vmul.f32 1.0, %v1379
    %v1381 = vtanh.pop %v1374
    %v1382 = vmul.f32 %v1380, 0.0
    %1384 = vrot.lane.b32.xlu0 %v1381, 64
    %v1385 = vpop.permute.xlu0 %1384
    %v1387 = vmul.f32 %v1380, %v1385
    %1389 = vrot.lane.b32.xlu0 %v1387, 32
    %v1390 = vpop.permute.xlu0 %1389
    %v1392 = vadd.f32 %v1382, %v1390
    %v1393 = vtanh.pop %v1392
    %1395 = vrot.lane.b32.xlu0 %v1393, 64
    %v1396 = vpop.permute.xlu0 %1395
    %v1398 = vmul.f32 %v1380, %v1396
    %1400 = vrot.lane.b32.xlu0 %v1398, 32
    %v1401 = vpop.permute.xlu0 %1400
    %v1402 = vsel %vm244, %v1401, 0
    %1404 = vmatprep.subr.mxu0 0.0
    %1405 = vmatpush1.msra.mxu0 %v1300
    %1406 = vmatprep.subr.mxu0 0.0
    %1407 = vmatpush1.msra.mxu0 %v1301
    %1408 = vmatprep.subr.mxu0 0.0
    %1409 = vmatpush1.msra.mxu0 %v1302
    %1410 = vmatprep.subr.mxu0 0.0
    %1411 = vmatpush1.msra.mxu0 %v1303
    %1412 = vmatprep.subr.mxu0 0.0
    %1413 = vmatpush1.msra.mxu0 0.0
    %1414 = vmatprep.subr.mxu0 0.0
    %1415 = vmatpush1.msra.mxu0 0.0
    %1416 = vmatprep.subr.mxu0 0.0
    %1417 = vmatpush1.msra.mxu0 0.0
    %1418 = vmatprep.subr.mxu0 0.0
    %1419 = vmatpush1.msra.mxu0 0.0
    %1420 = vmatprep.subr.mxu0 0.0
    %1421 = vmatpush1.msra.mxu0 0.0
    %1422 = vmatprep.subr.mxu0 0.0
    %1423 = vmatpush1.msra.mxu0 0.0
    %1424 = vmatprep.subr.mxu0 0.0
    %1425 = vmatpush1.msra.mxu0 0.0
    %1426 = vmatprep.subr.mxu0 0.0
    %1427 = vmatpush1.msra.mxu0 0.0
    %1428 = vmatprep.subr.mxu0 0.0
    %1429 = vmatpush1.msra.mxu0 0.0
    %1430 = vmatprep.subr.mxu0 0.0
    %1431 = vmatpush1.msra.mxu0 0.0
    %1432 = vmatprep.subr.mxu0 0.0
    %1433 = vmatpush1.msra.mxu0 0.0
    %1434 = vmatprep.subr.mxu0 0.0
    %1435 = vmatpush1.msra.mxu0 0.0
    %1436 = vmatprep.subr.mxu0 0.0
    %1437 = vmatpush1.msra.mxu0 0.0
    %1438 = vmatprep.subr.mxu0 0.0
    %1439 = vmatpush1.msra.mxu0 0.0
    %1440 = vmatprep.subr.mxu0 0.0
    %1441 = vmatpush1.msra.mxu0 0.0
    %1442 = vmatprep.subr.mxu0 0.0
    %1443 = vmatpush1.msra.mxu0 0.0
    %1444 = vmatprep.subr.mxu0 0.0
    %1445 = vmatpush1.msra.mxu0 0.0
    %1446 = vmatprep.subr.mxu0 0.0
    %1447 = vmatpush1.msra.mxu0 0.0
    %1448 = vmatprep.subr.mxu0 0.0
    %1449 = vmatpush1.msra.mxu0 0.0
    %1450 = vmatprep.subr.mxu0 0.0
    %1451 = vmatpush1.msra.mxu0 0.0
    %1452 = vmatprep.subr.mxu0 0.0
    %1453 = vmatpush1.msra.mxu0 0.0
    %1454 = vmatprep.subr.mxu0 0.0
    %1455 = vmatpush1.msra.mxu0 0.0
    %1456 = vmatprep.subr.mxu0 0.0
    %1457 = vmatpush1.msra.mxu0 0.0
    %1458 = vmatprep.subr.mxu0 0.0
    %1459 = vmatpush1.msra.mxu0 0.0
    %1460 = vmatprep.subr.mxu0 0.0
    %1461 = vmatpush1.msra.mxu0 0.0
    %1462 = vmatprep.subr.mxu0 0.0
    %1463 = vmatpush1.msra.mxu0 0.0
    %1464 = vmatprep.subr.mxu0 0.0
    %1465 = vmatpush1.msra.mxu0 0.0
    %1466 = vmatprep.subr.mxu0 0.0
    %1467 = vmatpush1.msra.mxu0 0.0
    %1468 = vmatprep.mubr.f32.mxu0 0.0
    %1469 = vmatmul.mubr.f32.gmra.mrb[0].mxu0 %v1402
    %v1470 = vpop.f32.mrb[0].mxu0
    %v1471 = vadd.f32 0.0, %v1470
    %v1472 = vpop.f32.mrb[0].mxu0
    %1473 = vdwg.mxu0
    %v1474 = vadd.f32 %v1266, %v1471
    %v1475 = vxor.u32 %v1474, 2147483648
    %v1476 = vmul.f32 %v1475, 1.442695
    %v1477 = vpow.pop %v1476
    %v1478 = vadd.f32 %v1477, 1.0
    %v1479 = vrcp.pop %v1478
    %v1480 = vmul.f32 1.0, %v1479
    %v1481 = vtanh.pop %v1474
    %v1482 = vmul.f32 %v1480, %v1392
    %1484 = vrot.lane.b32.xlu0 %v1481, 64
    %v1485 = vpop.permute.xlu0 %1484
    %v1487 = vmul.f32 %v1480, %v1485
    %1489 = vrot.lane.b32.xlu0 %v1487, 32
    %v1490 = vpop.permute.xlu0 %1489
    %v1492 = vadd.f32 %v1482, %v1490
    %v1493 = vtanh.pop %v1492
    %1495 = vrot.lane.b32.xlu0 %v1493, 64
    %v1496 = vpop.permute.xlu0 %1495
    %v1498 = vmul.f32 %v1480, %v1496
    %1500 = vrot.lane.b32.xlu0 %v1498, 32
    %v1501 = vpop.permute.xlu0 %1500
    %v1502 = vsel %vm244, %v1501, 0
    %1504 = vmatprep.subr.mxu0 0.0
    %1505 = vmatpush1.msra.mxu0 %v1300
    %1506 = vmatprep.subr.mxu0 0.0
    %1507 = vmatpush1.msra.mxu0 %v1301
    %1508 = vmatprep.subr.mxu0 0.0
    %1509 = vmatpush1.msra.mxu0 %v1302
    %1510 = vmatprep.subr.mxu0 0.0
    %1511 = vmatpush1.msra.mxu0 %v1303
    %1512 = vmatprep.subr.mxu0 0.0
    %1513 = vmatpush1.msra.mxu0 0.0
    %1514 = vmatprep.subr.mxu0 0.0
    %1515 = vmatpush1.msra.mxu0 0.0
    %1516 = vmatprep.subr.mxu0 0.0
    %1517 = vmatpush1.msra.mxu0 0.0
    %1518 = vmatprep.subr.mxu0 0.0
    %1519 = vmatpush1.msra.mxu0 0.0
    %1520 = vmatprep.subr.mxu0 0.0
    %1521 = vmatpush1.msra.mxu0 0.0
    %1522 = vmatprep.subr.mxu0 0.0
    %1523 = vmatpush1.msra.mxu0 0.0
    %1524 = vmatprep.subr.mxu0 0.0
    %1525 = vmatpush1.msra.mxu0 0.0
    %1526 = vmatprep.subr.mxu0 0.0
    %1527 = vmatpush1.msra.mxu0 0.0
    %1528 = vmatprep.subr.mxu0 0.0
    %1529 = vmatpush1.msra.mxu0 0.0
    %1530 = vmatprep.subr.mxu0 0.0
    %1531 = vmatpush1.msra.mxu0 0.0
    %1532 = vmatprep.subr.mxu0 0.0
    %1533 = vmatpush1.msra.mxu0 0.0
    %1534 = vmatprep.subr.mxu0 0.0
    %1535 = vmatpush1.msra.mxu0 0.0
    %1536 = vmatprep.subr.mxu0 0.0
    %1537 = vmatpush1.msra.mxu0 0.0
    %1538 = vmatprep.subr.mxu0 0.0
    %1539 = vmatpush1.msra.mxu0 0.0
    %1540 = vmatprep.subr.mxu0 0.0
    %1541 = vmatpush1.msra.mxu0 0.0
    %1542 = vmatprep.subr.mxu0 0.0
    %1543 = vmatpush1.msra.mxu0 0.0
    %1544 = vmatprep.subr.mxu0 0.0
    %1545 = vmatpush1.msra.mxu0 0.0
    %1546 = vmatprep.subr.mxu0 0.0
    %1547 = vmatpush1.msra.mxu0 0.0
    %1548 = vmatprep.subr.mxu0 0.0
    %1549 = vmatpush1.msra.mxu0 0.0
    %1550 = vmatprep.subr.mxu0 0.0
    %1551 = vmatpush1.msra.mxu0 0.0
    %1552 = vmatprep.subr.mxu0 0.0
    %1553 = vmatpush1.msra.mxu0 0.0
    %1554 = vmatprep.subr.mxu0 0.0
    %1555 = vmatpush1.msra.mxu0 0.0
    %1556 = vmatprep.subr.mxu0 0.0
    %1557 = vmatpush1.msra.mxu0 0.0
    %1558 = vmatprep.subr.mxu0 0.0
    %1559 = vmatpush1.msra.mxu0 0.0
    %1560 = vmatprep.subr.mxu0 0.0
    %1561 = vmatpush1.msra.mxu0 0.0
    %1562 = vmatprep.subr.mxu0 0.0
    %1563 = vmatpush1.msra.mxu0 0.0
    %1564 = vmatprep.subr.mxu0 0.0
    %1565 = vmatpush1.msra.mxu0 0.0
    %1566 = vmatprep.subr.mxu0 0.0
    %1567 = vmatpush1.msra.mxu0 0.0
    %1568 = vmatprep.mubr.f32.mxu0 0.0
    %1569 = vmatmul.mubr.f32.gmra.mrb[0].mxu0 %v1502
    %v1570 = vpop.f32.mrb[0].mxu0
    %v1571 = vadd.f32 0.0, %v1570
    %v1572 = vpop.f32.mrb[0].mxu0
    %1573 = vdwg.mxu0
    %v1574 = vadd.f32 %v1271, %v1571
    %v1575 = vxor.u32 %v1574, 2147483648
    %v1576 = vmul.f32 %v1575, 1.442695
    %v1577 = vpow.pop %v1576
    %v1578 = vadd.f32 %v1577, 1.0
    %v1579 = vrcp.pop %v1578
    %v1580 = vmul.f32 1.0, %v1579
    %v1581 = vtanh.pop %v1574
    %v1582 = vmul.f32 %v1580, %v1492
    %1584 = vrot.lane.b32.xlu0 %v1581, 64
    %v1585 = vpop.permute.xlu0 %1584
    %v1587 = vmul.f32 %v1580, %v1585
    %1589 = vrot.lane.b32.xlu0 %v1587, 32
    %v1590 = vpop.permute.xlu0 %1589
    %v1592 = vadd.f32 %v1582, %v1590
    %v1593 = vtanh.pop %v1592
    %1595 = vrot.lane.b32.xlu0 %v1593, 64
    %v1596 = vpop.permute.xlu0 %1595
    %v1598 = vmul.f32 %v1580, %v1596
    %1600 = vrot.lane.b32.xlu0 %v1598, 32
    %v1601 = vpop.permute.xlu0 %1600
    %v1602 = vsel %vm244, %v1601, 0
    %1604 = vmatprep.subr.mxu0 0.0
    %1605 = vmatpush1.msra.mxu0 %v1300
    %1606 = vmatprep.subr.mxu0 0.0
    %1607 = vmatpush1.msra.mxu0 %v1301
    %1608 = vmatprep.subr.mxu0 0.0
    %1609 = vmatpush1.msra.mxu0 %v1302
    %1610 = vmatprep.subr.mxu0 0.0
    %1611 = vmatpush1.msra.mxu0 %v1303
    %1612 = vmatprep.subr.mxu0 0.0
    %1613 = vmatpush1.msra.mxu0 0.0
    %1614 = vmatprep.subr.mxu0 0.0
    %1615 = vmatpush1.msra.mxu0 0.0
    %1616 = vmatprep.subr.mxu0 0.0
    %1617 = vmatpush1.msra.mxu0 0.0
    %1618 = vmatprep.subr.mxu0 0.0
    %1619 = vmatpush1.msra.mxu0 0.0
    %1620 = vmatprep.subr.mxu0 0.0
    %1621 = vmatpush1.msra.mxu0 0.0
    %1622 = vmatprep.subr.mxu0 0.0
    %1623 = vmatpush1.msra.mxu0 0.0
    %1624 = vmatprep.subr.mxu0 0.0
    %1625 = vmatpush1.msra.mxu0 0.0
    %1626 = vmatprep.subr.mxu0 0.0
    %1627 = vmatpush1.msra.mxu0 0.0
    %1628 = vmatprep.subr.mxu0 0.0
    %1629 = vmatpush1.msra.mxu0 0.0
    %1630 = vmatprep.subr.mxu0 0.0
    %1631 = vmatpush1.msra.mxu0 0.0
    %1632 = vmatprep.subr.mxu0 0.0
    %1633 = vmatpush1.msra.mxu0 0.0
    %1634 = vmatprep.subr.mxu0 0.0
    %1635 = vmatpush1.msra.mxu0 0.0
    %1636 = vmatprep.subr.mxu0 0.0
    %1637 = vmatpush1.msra.mxu0 0.0
    %1638 = vmatprep.subr.mxu0 0.0
    %1639 = vmatpush1.msra.mxu0 0.0
    %1640 = vmatprep.subr.mxu0 0.0
    %1641 = vmatpush1.msra.mxu0 0.0
    %1642 = vmatprep.subr.mxu0 0.0
    %1643 = vmatpush1.msra.mxu0 0.0
    %1644 = vmatprep.subr.mxu0 0.0
    %1645 = vmatpush1.msra.mxu0 0.0
    %1646 = vmatprep.subr.mxu0 0.0
    %1647 = vmatpush1.msra.mxu0 0.0
    %1648 = vmatprep.subr.mxu0 0.0
    %1649 = vmatpush1.msra.mxu0 0.0
    %1650 = vmatprep.subr.mxu0 0.0
    %1651 = vmatpush1.msra.mxu0 0.0
    %1652 = vmatprep.subr.mxu0 0.0
    %1653 = vmatpush1.msra.mxu0 0.0
    %1654 = vmatprep.subr.mxu0 0.0
    %1655 = vmatpush1.msra.mxu0 0.0
    %1656 = vmatprep.subr.mxu0 0.0
    %1657 = vmatpush1.msra.mxu0 0.0
    %1658 = vmatprep.subr.mxu0 0.0
    %1659 = vmatpush1.msra.mxu0 0.0
    %1660 = vmatprep.subr.mxu0 0.0
    %1661 = vmatpush1.msra.mxu0 0.0
    %1662 = vmatprep.subr.mxu0 0.0
    %1663 = vmatpush1.msra.mxu0 0.0
    %1664 = vmatprep.subr.mxu0 0.0
    %1665 = vmatpush1.msra.mxu0 0.0
    %1666 = vmatprep.subr.mxu0 0.0
    %1667 = vmatpush1.msra.mxu0 0.0
    %1668 = vmatprep.mubr.f32.mxu0 0.0
    %1669 = vmatmul.mubr.f32.gmra.mrb[0].mxu0 %v1602
    %v1670 = vpop.f32.mrb[0].mxu0
    %v1671 = vadd.f32 0.0, %v1670
    %v1672 = vpop.f32.mrb[0].mxu0
    %1673 = vdwg.mxu0
    %v1674 = vadd.f32 %v1276, %v1671
    %v1675 = vxor.u32 %v1674, 2147483648
    %v1676 = vmul.f32 %v1675, 1.442695
    %v1677 = vpow.pop %v1676
    %v1678 = vadd.f32 %v1677, 1.0
    %v1679 = vrcp.pop %v1678
    %v1680 = vmul.f32 1.0, %v1679
    %v1681 = vtanh.pop %v1674
    %v1682 = vmul.f32 %v1680, %v1592
    %1684 = vrot.lane.b32.xlu0 %v1681, 64
    %v1685 = vpop.permute.xlu0 %1684
    %v1687 = vmul.f32 %v1680, %v1685
    %1689 = vrot.lane.b32.xlu0 %v1687, 32
    %v1690 = vpop.permute.xlu0 %1689
    %v1692 = vadd.f32 %v1682, %v1690
    %v1693 = vtanh.pop %v1692
    %1695 = vrot.lane.b32.xlu0 %v1693, 64
    %v1696 = vpop.permute.xlu0 %1695
    %v1698 = vmul.f32 %v1680, %v1696
    %1700 = vrot.lane.b32.xlu0 %v1698, 32
    %v1701 = vpop.permute.xlu0 %1700
    %v1702 = vsel %vm244, %v1701, 0
    %1704 = vmatprep.subr.mxu0 0.0
    %1705 = vmatpush1.msra.mxu0 %v1300
    %1706 = vmatprep.subr.mxu0 0.0
    %1707 = vmatpush1.msra.mxu0 %v1301
    %1708 = vmatprep.subr.mxu0 0.0
    %1709 = vmatpush1.msra.mxu0 %v1302
    %1710 = vmatprep.subr.mxu0 0.0
    %1711 = vmatpush1.msra.mxu0 %v1303
    %1712 = vmatprep.subr.mxu0 0.0
    %1713 = vmatpush1.msra.mxu0 0.0
    %1714 = vmatprep.subr.mxu0 0.0
    %1715 = vmatpush1.msra.mxu0 0.0
    %1716 = vmatprep.subr.mxu0 0.0
    %1717 = vmatpush1.msra.mxu0 0.0
    %1718 = vmatprep.subr.mxu0 0.0
    %1719 = vmatpush1.msra.mxu0 0.0
    %1720 = vmatprep.subr.mxu0 0.0
    %1721 = vmatpush1.msra.mxu0 0.0
    %1722 = vmatprep.subr.mxu0 0.0
    %1723 = vmatpush1.msra.mxu0 0.0
    %1724 = vmatprep.subr.mxu0 0.0
    %1725 = vmatpush1.msra.mxu0 0.0
    %1726 = vmatprep.subr.mxu0 0.0
    %1727 = vmatpush1.msra.mxu0 0.0
    %1728 = vmatprep.subr.mxu0 0.0
    %1729 = vmatpush1.msra.mxu0 0.0
    %1730 = vmatprep.subr.mxu0 0.0
    %1731 = vmatpush1.msra.mxu0 0.0
    %1732 = vmatprep.subr.mxu0 0.0
    %1733 = vmatpush1.msra.mxu0 0.0
    %1734 = vmatprep.subr.mxu0 0.0
    %1735 = vmatpush1.msra.mxu0 0.0
    %1736 = vmatprep.subr.mxu0 0.0
    %1737 = vmatpush1.msra.mxu0 0.0
    %1738 = vmatprep.subr.mxu0 0.0
    %1739 = vmatpush1.msra.mxu0 0.0
    %1740 = vmatprep.subr.mxu0 0.0
    %1741 = vmatpush1.msra.mxu0 0.0
    %1742 = vmatprep.subr.mxu0 0.0
    %1743 = vmatpush1.msra.mxu0 0.0
    %1744 = vmatprep.subr.mxu0 0.0
    %1745 = vmatpush1.msra.mxu0 0.0
    %1746 = vmatprep.subr.mxu0 0.0
    %1747 = vmatpush1.msra.mxu0 0.0
    %1748 = vmatprep.subr.mxu0 0.0
    %1749 = vmatpush1.msra.mxu0 0.0
    %1750 = vmatprep.subr.mxu0 0.0
    %1751 = vmatpush1.msra.mxu0 0.0
    %1752 = vmatprep.subr.mxu0 0.0
    %1753 = vmatpush1.msra.mxu0 0.0
    %1754 = vmatprep.subr.mxu0 0.0
    %1755 = vmatpush1.msra.mxu0 0.0
    %1756 = vmatprep.subr.mxu0 0.0
    %1757 = vmatpush1.msra.mxu0 0.0
    %1758 = vmatprep.subr.mxu0 0.0
    %1759 = vmatpush1.msra.mxu0 0.0
    %1760 = vmatprep.subr.mxu0 0.0
    %1761 = vmatpush1.msra.mxu0 0.0
    %1762 = vmatprep.subr.mxu0 0.0
    %1763 = vmatpush1.msra.mxu0 0.0
    %1764 = vmatprep.subr.mxu0 0.0
    %1765 = vmatpush1.msra.mxu0 0.0
    %1766 = vmatprep.subr.mxu0 0.0
    %1767 = vmatpush1.msra.mxu0 0.0
    %1768 = vmatprep.mubr.f32.mxu0 0.0
    %1769 = vmatmul.mubr.f32.gmra.mrb[0].mxu0 %v1702
    %v1770 = vpop.f32.mrb[0].mxu0
    %v1771 = vadd.f32 0.0, %v1770
    %v1772 = vpop.f32.mrb[0].mxu0
    %1773 = vdwg.mxu0
    %v1774 = vadd.f32 %v1281, %v1771
    %v1775 = vxor.u32 %v1774, 2147483648
    %v1776 = vmul.f32 %v1775, 1.442695
    %v1777 = vpow.pop %v1776
    %v1778 = vadd.f32 %v1777, 1.0
    %v1779 = vrcp.pop %v1778
    %v1780 = vmul.f32 1.0, %v1779
    %v1781 = vtanh.pop %v1774
    %v1782 = vmul.f32 %v1780, %v1692
    %1784 = vrot.lane.b32.xlu0 %v1781, 64
    %v1785 = vpop.permute.xlu0 %1784
    %v1787 = vmul.f32 %v1780, %v1785
    %1789 = vrot.lane.b32.xlu0 %v1787, 32
    %v1790 = vpop.permute.xlu0 %1789
    %v1792 = vadd.f32 %v1782, %v1790
    %v1793 = vtanh.pop %v1792
    %1795 = vrot.lane.b32.xlu0 %v1793, 64
    %v1796 = vpop.permute.xlu0 %1795
    %v1798 = vmul.f32 %v1780, %v1796
    %1800 = vrot.lane.b32.xlu0 %v1798, 32
    %v1801 = vpop.permute.xlu0 %1800
    %v1802 = vsel %vm244, %v1801, 0
    %1804 = vmatprep.subr.mxu0 0.0
    %1805 = vmatpush1.msra.mxu0 %v1300
    %1806 = vmatprep.subr.mxu0 0.0
    %1807 = vmatpush1.msra.mxu0 %v1301
    %1808 = vmatprep.subr.mxu0 0.0
    %1809 = vmatpush1.msra.mxu0 %v1302
    %1810 = vmatprep.subr.mxu0 0.0
    %1811 = vmatpush1.msra.mxu0 %v1303
    %1812 = vmatprep.subr.mxu0 0.0
    %1813 = vmatpush1.msra.mxu0 0.0
    %1814 = vmatprep.subr.mxu0 0.0
    %1815 = vmatpush1.msra.mxu0 0.0
    %1816 = vmatprep.subr.mxu0 0.0
    %1817 = vmatpush1.msra.mxu0 0.0
    %1818 = vmatprep.subr.mxu0 0.0
    %1819 = vmatpush1.msra.mxu0 0.0
    %1820 = vmatprep.subr.mxu0 0.0
    %1821 = vmatpush1.msra.mxu0 0.0
    %1822 = vmatprep.subr.mxu0 0.0
    %1823 = vmatpush1.msra.mxu0 0.0
    %1824 = vmatprep.subr.mxu0 0.0
    %1825 = vmatpush1.msra.mxu0 0.0
    %1826 = vmatprep.subr.mxu0 0.0
    %1827 = vmatpush1.msra.mxu0 0.0
    %1828 = vmatprep.subr.mxu0 0.0
    %1829 = vmatpush1.msra.mxu0 0.0
    %1830 = vmatprep.subr.mxu0 0.0
    %1831 = vmatpush1.msra.mxu0 0.0
    %1832 = vmatprep.subr.mxu0 0.0
    %1833 = vmatpush1.msra.mxu0 0.0
    %1834 = vmatprep.subr.mxu0 0.0
    %1835 = vmatpush1.msra.mxu0 0.0
    %1836 = vmatprep.subr.mxu0 0.0
    %1837 = vmatpush1.msra.mxu0 0.0
    %1838 = vmatprep.subr.mxu0 0.0
    %1839 = vmatpush1.msra.mxu0 0.0
    %1840 = vmatprep.subr.mxu0 0.0
    %1841 = vmatpush1.msra.mxu0 0.0
    %1842 = vmatprep.subr.mxu0 0.0
    %1843 = vmatpush1.msra.mxu0 0.0
    %1844 = vmatprep.subr.mxu0 0.0
    %1845 = vmatpush1.msra.mxu0 0.0
    %1846 = vmatprep.subr.mxu0 0.0
    %1847 = vmatpush1.msra.mxu0 0.0
    %1848 = vmatprep.subr.mxu0 0.0
    %1849 = vmatpush1.msra.mxu0 0.0
    %1850 = vmatprep.subr.mxu0 0.0
    %1851 = vmatpush1.msra.mxu0 0.0
    %1852 = vmatprep.subr.mxu0 0.0
    %1853 = vmatpush1.msra.mxu0 0.0
    %1854 = vmatprep.subr.mxu0 0.0
    %1855 = vmatpush1.msra.mxu0 0.0
    %1856 = vmatprep.subr.mxu0 0.0
    %1857 = vmatpush1.msra.mxu0 0.0
    %1858 = vmatprep.subr.mxu0 0.0
    %1859 = vmatpush1.msra.mxu0 0.0
    %1860 = vmatprep.subr.mxu0 0.0
    %1861 = vmatpush1.msra.mxu0 0.0
    %1862 = vmatprep.subr.mxu0 0.0
    %1863 = vmatpush1.msra.mxu0 0.0
    %1864 = vmatprep.subr.mxu0 0.0
    %1865 = vmatpush1.msra.mxu0 0.0
    %1866 = vmatprep.subr.mxu0 0.0
    %1867 = vmatpush1.msra.mxu0 0.0
    %1868 = vmatprep.mubr.f32.mxu0 0.0
    %1869 = vmatmul.mubr.f32.gmra.mrb[0].mxu0 %v1802
    %v1870 = vpop.f32.mrb[0].mxu0
    %v1871 = vadd.f32 0.0, %v1870
    %v1872 = vpop.f32.mrb[0].mxu0
    %1873 = vdwg.mxu0
    %v1874 = vadd.f32 %v1286, %v1871
    %v1875 = vxor.u32 %v1874, 2147483648
    %v1876 = vmul.f32 %v1875, 1.442695
    %v1877 = vpow.pop %v1876
    %v1878 = vadd.f32 %v1877, 1.0
    %v1879 = vrcp.pop %v1878
    %v1880 = vmul.f32 1.0, %v1879
    %v1881 = vtanh.pop %v1874
    %v1882 = vmul.f32 %v1880, %v1792
    %1884 = vrot.lane.b32.xlu0 %v1881, 64
    %v1885 = vpop.permute.xlu0 %1884
    %v1887 = vmul.f32 %v1880, %v1885
    %1889 = vrot.lane.b32.xlu0 %v1887, 32
    %v1890 = vpop.permute.xlu0 %1889
    %v1892 = vadd.f32 %v1882, %v1890
    %v1893 = vtanh.pop %v1892
    %1895 = vrot.lane.b32.xlu0 %v1893, 64
    %v1896 = vpop.permute.xlu0 %1895
    %v1898 = vmul.f32 %v1880, %v1896
    %1900 = vrot.lane.b32.xlu0 %v1898, 32
    %v1901 = vpop.permute.xlu0 %1900
    %v1902 = vsel %vm244, %v1901, 0
    %1904 = vmatprep.subr.mxu0 0.0
    %1905 = vmatpush1.msra.mxu0 %v1300
    %1906 = vmatprep.subr.mxu0 0.0
    %1907 = vmatpush1.msra.mxu0 %v1301
    %1908 = vmatprep.subr.mxu0 0.0
    %1909 = vmatpush1.msra.mxu0 %v1302
    %1910 = vmatprep.subr.mxu0 0.0
    %1911 = vmatpush1.msra.mxu0 %v1303
    %1912 = vmatprep.subr.mxu0 0.0
    %1913 = vmatpush1.msra.mxu0 0.0
    %1914 = vmatprep.subr.mxu0 0.0
    %1915 = vmatpush1.msra.mxu0 0.0
    %1916 = vmatprep.subr.mxu0 0.0
    %1917 = vmatpush1.msra.mxu0 0.0
    %1918 = vmatprep.subr.mxu0 0.0
    %1919 = vmatpush1.msra.mxu0 0.0
    %1920 = vmatprep.subr.mxu0 0.0
    %1921 = vmatpush1.msra.mxu0 0.0
    %1922 = vmatprep.subr.mxu0 0.0
    %1923 = vmatpush1.msra.mxu0 0.0
    %1924 = vmatprep.subr.mxu0 0.0
    %1925 = vmatpush1.msra.mxu0 0.0
    %1926 = vmatprep.subr.mxu0 0.0
    %1927 = vmatpush1.msra.mxu0 0.0
    %1928 = vmatprep.subr.mxu0 0.0
    %1929 = vmatpush1.msra.mxu0 0.0
    %1930 = vmatprep.subr.mxu0 0.0
    %1931 = vmatpush1.msra.mxu0 0.0
    %1932 = vmatprep.subr.mxu0 0.0
    %1933 = vmatpush1.msra.mxu0 0.0
    %1934 = vmatprep.subr.mxu0 0.0
    %1935 = vmatpush1.msra.mxu0 0.0
    %1936 = vmatprep.subr.mxu0 0.0
    %1937 = vmatpush1.msra.mxu0 0.0
    %1938 = vmatprep.subr.mxu0 0.0
    %1939 = vmatpush1.msra.mxu0 0.0
    %1940 = vmatprep.subr.mxu0 0.0
    %1941 = vmatpush1.msra.mxu0 0.0
    %1942 = vmatprep.subr.mxu0 0.0
    %1943 = vmatpush1.msra.mxu0 0.0
    %1944 = vmatprep.subr.mxu0 0.0
    %1945 = vmatpush1.msra.mxu0 0.0
    %1946 = vmatprep.subr.mxu0 0.0
    %1947 = vmatpush1.msra.mxu0 0.0
    %1948 = vmatprep.subr.mxu0 0.0
    %1949 = vmatpush1.msra.mxu0 0.0
    %1950 = vmatprep.subr.mxu0 0.0
    %1951 = vmatpush1.msra.mxu0 0.0
    %1952 = vmatprep.subr.mxu0 0.0
    %1953 = vmatpush1.msra.mxu0 0.0
    %1954 = vmatprep.subr.mxu0 0.0
    %1955 = vmatpush1.msra.mxu0 0.0
    %1956 = vmatprep.subr.mxu0 0.0
    %1957 = vmatpush1.msra.mxu0 0.0
    %1958 = vmatprep.subr.mxu0 0.0
    %1959 = vmatpush1.msra.mxu0 0.0
    %1960 = vmatprep.subr.mxu0 0.0
    %1961 = vmatpush1.msra.mxu0 0.0
    %1962 = vmatprep.subr.mxu0 0.0
    %1963 = vmatpush1.msra.mxu0 0.0
    %1964 = vmatprep.subr.mxu0 0.0
    %1965 = vmatpush1.msra.mxu0 0.0
    %1966 = vmatprep.subr.mxu0 0.0
    %1967 = vmatpush1.msra.mxu0 0.0
    %1968 = vmatprep.mubr.f32.mxu0 0.0
    %1969 = vmatmul.mubr.f32.gmra.mrb[0].mxu0 %v1902
    %v1970 = vpop.f32.mrb[0].mxu0
    %v1971 = vadd.f32 0.0, %v1970
    %v1972 = vpop.f32.mrb[0].mxu0
    %1973 = vdwg.mxu0
    %v1974 = vadd.f32 %v1291, %v1971
    %v1975 = vxor.u32 %v1974, 2147483648
    %v1976 = vmul.f32 %v1975, 1.442695
    %v1977 = vpow.pop %v1976
    %v1978 = vadd.f32 %v1977, 1.0
    %v1979 = vrcp.pop %v1978
    %v1980 = vmul.f32 1.0, %v1979
    %v1981 = vtanh.pop %v1974
    %v1982 = vmul.f32 %v1980, %v1892
    %1984 = vrot.lane.b32.xlu0 %v1981, 64
    %v1985 = vpop.permute.xlu0 %1984
    %v1987 = vmul.f32 %v1980, %v1985
    %1989 = vrot.lane.b32.xlu0 %v1987, 32
    %v1990 = vpop.permute.xlu0 %1989
    %v1992 = vadd.f32 %v1982, %v1990
    %v1993 = vtanh.pop %v1992
    %1995 = vrot.lane.b32.xlu0 %v1993, 64
    %v1996 = vpop.permute.xlu0 %1995
    %v1998 = vmul.f32 %v1980, %v1996
    %2000 = vrot.lane.b32.xlu0 %v1998, 32
    %v2001 = vpop.permute.xlu0 %2000
    %v2002 = vsel %vm244, %v2001, 0
    %2004 = vmatprep.subr.mxu0 0.0
    %2005 = vmatpush1.msra.mxu0 %v1300
    %2006 = vmatprep.subr.mxu0 0.0
    %2007 = vmatpush1.msra.mxu0 %v1301
    %2008 = vmatprep.subr.mxu0 0.0
    %2009 = vmatpush1.msra.mxu0 %v1302
    %2010 = vmatprep.subr.mxu0 0.0
    %2011 = vmatpush1.msra.mxu0 %v1303
    %2012 = vmatprep.subr.mxu0 0.0
    %2013 = vmatpush1.msra.mxu0 0.0
    %2014 = vmatprep.subr.mxu0 0.0
    %2015 = vmatpush1.msra.mxu0 0.0
    %2016 = vmatprep.subr.mxu0 0.0
    %2017 = vmatpush1.msra.mxu0 0.0
    %2018 = vmatprep.subr.mxu0 0.0
    %2019 = vmatpush1.msra.mxu0 0.0
    %2020 = vmatprep.subr.mxu0 0.0
    %2021 = vmatpush1.msra.mxu0 0.0
    %2022 = vmatprep.subr.mxu0 0.0
    %2023 = vmatpush1.msra.mxu0 0.0
    %2024 = vmatprep.subr.mxu0 0.0
    %2025 = vmatpush1.msra.mxu0 0.0
    %2026 = vmatprep.subr.mxu0 0.0
    %2027 = vmatpush1.msra.mxu0 0.0
    %2028 = vmatprep.subr.mxu0 0.0
    %2029 = vmatpush1.msra.mxu0 0.0
    %2030 = vmatprep.subr.mxu0 0.0
    %2031 = vmatpush1.msra.mxu0 0.0
    %2032 = vmatprep.subr.mxu0 0.0
    %2033 = vmatpush1.msra.mxu0 0.0
    %2034 = vmatprep.subr.mxu0 0.0
    %2035 = vmatpush1.msra.mxu0 0.0
    %2036 = vmatprep.subr.mxu0 0.0
    %2037 = vmatpush1.msra.mxu0 0.0
    %2038 = vmatprep.subr.mxu0 0.0
    %2039 = vmatpush1.msra.mxu0 0.0
    %2040 = vmatprep.subr.mxu0 0.0
    %2041 = vmatpush1.msra.mxu0 0.0
    %2042 = vmatprep.subr.mxu0 0.0
    %2043 = vmatpush1.msra.mxu0 0.0
    %2044 = vmatprep.subr.mxu0 0.0
    %2045 = vmatpush1.msra.mxu0 0.0
    %2046 = vmatprep.subr.mxu0 0.0
    %2047 = vmatpush1.msra.mxu0 0.0
    %2048 = vmatprep.subr.mxu0 0.0
    %2049 = vmatpush1.msra.mxu0 0.0
    %2050 = vmatprep.subr.mxu0 0.0
    %2051 = vmatpush1.msra.mxu0 0.0
    %2052 = vmatprep.subr.mxu0 0.0
    %2053 = vmatpush1.msra.mxu0 0.0
    %2054 = vmatprep.subr.mxu0 0.0
    %2055 = vmatpush1.msra.mxu0 0.0
    %2056 = vmatprep.subr.mxu0 0.0
    %2057 = vmatpush1.msra.mxu0 0.0
    %2058 = vmatprep.subr.mxu0 0.0
    %2059 = vmatpush1.msra.mxu0 0.0
    %2060 = vmatprep.subr.mxu0 0.0
    %2061 = vmatpush1.msra.mxu0 0.0
    %2062 = vmatprep.subr.mxu0 0.0
    %2063 = vmatpush1.msra.mxu0 0.0
    %2064 = vmatprep.subr.mxu0 0.0
    %2065 = vmatpush1.msra.mxu0 0.0
    %2066 = vmatprep.subr.mxu0 0.0
    %2067 = vmatpush1.msra.mxu0 0.0
    %2068 = vmatprep.mubr.f32.mxu0 0.0
    %2069 = vmatmul.mubr.f32.gmra.mrb[0].mxu0 %v2002
    %v2070 = vpop.f32.mrb[0].mxu0
    %v2071 = vadd.f32 0.0, %v2070
    %v2072 = vpop.f32.mrb[0].mxu0
    %2073 = vdwg.mxu0
    %v2074 = vadd.f32 %v1296, %v2071
    %v2075 = vxor.u32 %v2074, 2147483648
    %v2076 = vmul.f32 %v2075, 1.442695
    %v2077 = vpow.pop %v2076
    %v2078 = vadd.f32 %v2077, 1.0
    %v2079 = vrcp.pop %v2078
    %v2080 = vmul.f32 1.0, %v2079
    %v2081 = vtanh.pop %v2074
    %v2082 = vmul.f32 %v2080, %v1992
    %2084 = vrot.lane.b32.xlu0 %v2081, 64
    %v2085 = vpop.permute.xlu0 %2084
    %v2087 = vmul.f32 %v2080, %v2085
    %2089 = vrot.lane.b32.xlu0 %v2087, 32
    %v2090 = vpop.permute.xlu0 %2089
    %v2092 = vadd.f32 %v2082, %v2090
    %v2093 = vtanh.pop %v2092
    %2095 = vrot.lane.b32.xlu0 %v2093, 64
    %v2096 = vpop.permute.xlu0 %2095
    %v2098 = vmul.f32 %v2080, %v2096
    %v2099 = vld [vmem:[%s5] sm:$0xff]
    %v2100 = vld [vmem:[%s5 + $0x8] sm:$0xff]
    %v2101 = vld [vmem:[%s5 + $0x10] sm:$0xff]
    %v2102 = vld [vmem:[%s5 + $0x18] sm:$0xff]
    %v2103 = vld [vmem:[%s6] sm:$0x1]
    %v2105 = vlaneseq
    %v2106 = vshrl.u32 %v2105, 7
    %v2107 = vsub.s32 0, %v2106
    %v2108 = vrot.slane %v2103, %v2107
    %2111 = vrot.lane.b32.xlu0 %v2098, 32
    %v2112 = vpop.permute.xlu0 %2111
    %v2113 = vsel %vm244, %v2112, 0
    %2115 = vmatprep.subr.mxu0 0.0
    %2116 = vmatpush1.msra.mxu0 %v2099
    %2117 = vmatprep.subr.mxu0 0.0
    %2118 = vmatpush1.msra.mxu0 %v2100
    %2119 = vmatprep.subr.mxu0 0.0
    %2120 = vmatpush1.msra.mxu0 %v2101
    %2121 = vmatprep.subr.mxu0 0.0
    %2122 = vmatpush1.msra.mxu0 %v2102
    %2123 = vmatprep.subr.mxu0 0.0
    %2124 = vmatpush1.msra.mxu0 0.0
    %2125 = vmatprep.subr.mxu0 0.0
    %2126 = vmatpush1.msra.mxu0 0.0
    %2127 = vmatprep.subr.mxu0 0.0
    %2128 = vmatpush1.msra.mxu0 0.0
    %2129 = vmatprep.subr.mxu0 0.0
    %2130 = vmatpush1.msra.mxu0 0.0
    %2131 = vmatprep.subr.mxu0 0.0
    %2132 = vmatpush1.msra.mxu0 0.0
    %2133 = vmatprep.subr.mxu0 0.0
    %2134 = vmatpush1.msra.mxu0 0.0
    %2135 = vmatprep.subr.mxu0 0.0
    %2136 = vmatpush1.msra.mxu0 0.0
    %2137 = vmatprep.subr.mxu0 0.0
    %2138 = vmatpush1.msra.mxu0 0.0
    %2139 = vmatprep.subr.mxu0 0.0
    %2140 = vmatpush1.msra.mxu0 0.0
    %2141 = vmatprep.subr.mxu0 0.0
    %2142 = vmatpush1.msra.mxu0 0.0
    %2143 = vmatprep.subr.mxu0 0.0
    %2144 = vmatpush1.msra.mxu0 0.0
    %2145 = vmatprep.subr.mxu0 0.0
    %2146 = vmatpush1.msra.mxu0 0.0
    %2147 = vmatprep.subr.mxu0 0.0
    %2148 = vmatpush1.msra.mxu0 0.0
    %2149 = vmatprep.subr.mxu0 0.0
    %2150 = vmatpush1.msra.mxu0 0.0
    %2151 = vmatprep.subr.mxu0 0.0
    %2152 = vmatpush1.msra.mxu0 0.0
    %2153 = vmatprep.subr.mxu0 0.0
    %2154 = vmatpush1.msra.mxu0 0.0
    %2155 = vmatprep.subr.mxu0 0.0
    %2156 = vmatpush1.msra.mxu0 0.0
    %2157 = vmatprep.subr.mxu0 0.0
    %2158 = vmatpush1.msra.mxu0 0.0
    %2159 = vmatprep.subr.mxu0 0.0
    %2160 = vmatpush1.msra.mxu0 0.0
    %2161 = vmatprep.subr.mxu0 0.0
    %2162 = vmatpush1.msra.mxu0 0.0
    %2163 = vmatprep.subr.mxu0 0.0
    %2164 = vmatpush1.msra.mxu0 0.0
    %2165 = vmatprep.subr.mxu0 0.0
    %2166 = vmatpush1.msra.mxu0 0.0
    %2167 = vmatprep.subr.mxu0 0.0
    %2168 = vmatpush1.msra.mxu0 0.0
    %2169 = vmatprep.subr.mxu0 0.0
    %2170 = vmatpush1.msra.mxu0 0.0
    %2171 = vmatprep.subr.mxu0 0.0
    %2172 = vmatpush1.msra.mxu0 0.0
    %2173 = vmatprep.subr.mxu0 0.0
    %2174 = vmatpush1.msra.mxu0 0.0
    %2175 = vmatprep.subr.mxu0 0.0
    %2176 = vmatpush1.msra.mxu0 0.0
    %2177 = vmatprep.subr.mxu0 0.0
    %2178 = vmatpush1.msra.mxu0 0.0
    %2179 = vmatprep.mubr.f32.mxu0 0.0
    %2180 = vmatmul.mubr.f32.gmra.mrb[0].mxu0 %v1402
    %v2181 = vpop.f32.mrb[0].mxu0
    %v2182 = vadd.f32 %v2108, %v2181
    %v2183 = vpop.f32.mrb[0].mxu0
    %2184 = vmatprep.mubr.f32.mxu0 0.0
    %2185 = vmatmul.mubr.f32.gmra.mrb[0].mxu0 %v1502
    %v2186 = vpop.f32.mrb[0].mxu0
    %v2187 = vadd.f32 %v2108, %v2186
    %v2188 = vpop.f32.mrb[0].mxu0
    %2189 = vmatprep.mubr.f32.mxu0 0.0
    %2190 = vmatmul.mubr.f32.gmra.mrb[0].mxu0 %v1602
    %v2191 = vpop.f32.mrb[0].mxu0
    %v2192 = vadd.f32 %v2108, %v2191
    %v2193 = vpop.f32.mrb[0].mxu0
    %2194 = vmatprep.mubr.f32.mxu0 0.0
    %2195 = vmatmul.mubr.f32.gmra.mrb[0].mxu0 %v1702
    %v2196 = vpop.f32.mrb[0].mxu0
    %v2197 = vadd.f32 %v2108, %v2196
    %v2198 = vpop.f32.mrb[0].mxu0
    %2199 = vmatprep.mubr.f32.mxu0 0.0
    %2200 = vmatmul.mubr.f32.gmra.mrb[0].mxu0 %v1802
    %v2201 = vpop.f32.mrb[0].mxu0
    %v2202 = vadd.f32 %v2108, %v2201
    %v2203 = vpop.f32.mrb[0].mxu0
    %2204 = vmatprep.mubr.f32.mxu0 0.0
    %2205 = vmatmul.mubr.f32.gmra.mrb[0].mxu0 %v1902
    %v2206 = vpop.f32.mrb[0].mxu0
    %v2207 = vadd.f32 %v2108, %v2206
    %v2208 = vpop.f32.mrb[0].mxu0
    %2209 = vmatprep.mubr.f32.mxu0 0.0
    %2210 = vmatmul.mubr.f32.gmra.mrb[0].mxu0 %v2002
    %v2211 = vpop.f32.mrb[0].mxu0
    %v2212 = vadd.f32 %v2108, %v2211
    %v2213 = vpop.f32.mrb[0].mxu0
    %2214 = vmatprep.mubr.f32.mxu0 0.0
    %2215 = vmatmul.mubr.f32.gmra.mrb[0].mxu0 %v2113
    %v2216 = vpop.f32.mrb[0].mxu0
    %v2217 = vadd.f32 %v2108, %v2216
    %v2218 = vpop.f32.mrb[0].mxu0
    %2219 = vdwg.mxu0
    %2220 = vst [vmem:[%s7] sm:$0xff] %v2182
    %2221 = vst [vmem:[%s7 + $0x8] sm:$0xff] %v2187
    %2222 = vst [vmem:[%s7 + $0x10] sm:$0xff] %v2192
    %2223 = vst [vmem:[%s7 + $0x18] sm:$0xff] %v2197
    %2224 = vst [vmem:[%s7 + $0x20] sm:$0xff] %v2202
    %2225 = vst [vmem:[%s7 + $0x28] sm:$0xff] %v2207
    %2226 = vst [vmem:[%s7 + $0x30] sm:$0xff] %v2212
    %2227 = vst [vmem:[%s7 + $0x38] sm:$0xff] %v2217
    // Predicated region
    $region38: #{forward.1} parent=1 // pred_check
      _
    $region39: #{forward.1} parent=1 // pred_check_branch
      %2229 = sbr.rel (0) target = $region41
    $region40: #{forward.1} parent=1 // pred_region
      _
    $region41: #{forward.1} parent=1 // pred_fallthru
      _
    // Predicated region
    $region42: #{forward.1} parent=1 // pred_check
      _
    $region43: #{forward.1} parent=1 // pred_check_branch
      %2231 = sbr.rel (0) target = $region45
    $region44: #{forward.1} parent=1 // pred_region
      _
    $region45: #{forward.1} parent=1 // pred_fallthru
      _
    %2232 = vsyncpa [#allocation3], 1
    %2233 = vsyncpa [#allocation5], 1

</llo_original>
